<compile_context>
chip_gen: v6e
topology: v6e:2x2x1
jax: 0.10.0
libtpu: 0.0.40
codegen_flags: <defaults>
</compile_context>

<pallas_src>
import jax
import jax.numpy as jnp
from jax.experimental import pallas as pl
from jax.experimental.pallas import tpu as pltpu

# small, forward-consistent sizes
B = 2        # batch
T = 8        # number of sampled points per batch element
DIM = 3      # point dimension
Z_DIM = 2    # latent z dimension (module default z_dim=2)
C_DIM = 8    # conditioning code dimension (c = inputs)
H = 32       # decoder hidden size
NBLK = 5     # resnet blocks in DecoderBatchNorm
EPS = 1e-5   # BatchNorm eps

ROWS = B * T

# ---- parameter slab layout: one contiguous (SLAB_ROWS, H) f32 array ---------
OFF_WPT = 0                              # rows [0, DIM): wp^T  (DIM, H)
OFF_W = 8                                # block weights, 8-sublane aligned
W_STRIDE = 2 * H                         # per block: w0^T (H,H) then w1^T (H,H)
OFF_VEC = OFF_W + NBLK * W_STRIDE        # per-block vectors (6 rows each)
VEC_STRIDE = 6                           # [scale0, shift0, scale1, shift1, bias0, bias1]
OFF_FIN = OFF_VEC + NBLK * VEC_STRIDE    # [scale_f, shift_f, wout, bout(@col 0)]
SLAB_ROWS = OFF_FIN + 4                  # = 362


def decoder_kernel(p_ref, bias_ref, slab_ref, out_ref):
    """One row-block of the flattened batch. Activations are (RB, H), channel-last
    so every 1x1 Conv1d is a (RB, C_in) @ (C_in, C_out) MXU matmul."""
    x = p_ref[...]                                            # (RB, DIM)
    wpT = slab_ref[OFF_WPT:OFF_WPT + DIM, :]                  # (DIM, H)
    # fc_p(p) + [bp + bz + bc + z@wz^T + c@wc^T] (folded into bias_ref on host)
    net = jnp.dot(x, wpT, preferred_element_type=jnp.float32) + bias_ref[...]

    # 5 x ResnetBlockConv1d (static unroll); BN pre-folded to scale/shift FMA.
    for i in range(NBLK):
        wb = OFF_W + i * W_STRIDE
        vb = OFF_VEC + i * VEC_STRIDE
        s0 = slab_ref[vb + 0:vb + 1, :]
        t0 = slab_ref[vb + 1:vb + 2, :]
        s1 = slab_ref[vb + 2:vb + 3, :]
        t1 = slab_ref[vb + 3:vb + 4, :]
        b0 = slab_ref[vb + 4:vb + 5, :]
        b1 = slab_ref[vb + 5:vb + 6, :]
        w0T = slab_ref[wb:wb + H, :]                          # (H, H) pre-transposed
        w1T = slab_ref[wb + H:wb + 2 * H, :]                  # (H, H) pre-transposed

        h = jnp.maximum(net * s0 + t0, 0.0)                   # relu(bn_0(net))
        h = jnp.dot(h, w0T, preferred_element_type=jnp.float32) + b0
        h = jnp.maximum(h * s1 + t1, 0.0)                     # relu(bn_1(h))
        net = net + jnp.dot(h, w1T, preferred_element_type=jnp.float32) + b1

    # final bn -> relu -> fc_out (H -> 1)
    sf = slab_ref[OFF_FIN + 0:OFF_FIN + 1, :]
    tf = slab_ref[OFF_FIN + 1:OFF_FIN + 2, :]
    wout = slab_ref[OFF_FIN + 2:OFF_FIN + 3, :]               # (1, H)
    bout = slab_ref[OFF_FIN + 3:OFF_FIN + 4, 0:1]             # (1, 1)

    h = jnp.maximum(net * sf + tf, 0.0)
    # NOTE: last output dim of 1 -> masked store; negligible at 16 outputs.
    out_ref[...] = jnp.sum(h * wout, axis=-1, keepdims=True) + bout   # (RB, 1)


def _row_blocks():
    """2-way row split only on v7x (2 TensorCores); on v5e/v6e (1 TC) extra
    grid steps are pure per-step overhead, so use a single step."""
    try:
        kind = jax.devices()[0].device_kind.lower()
    except Exception:
        kind = ""
    return 2 if ("v7" in kind or "tpu7" in kind) else 1


def occupancy_network_forward(p, inputs, z, params):
    """p: (B, T, DIM), inputs: (B, C_DIM), z: (B, Z_DIM). Returns (logits, probs)."""
    Bsz, Tn, _ = p.shape
    rows = Bsz * Tn

    # encode_inputs: encoder is None, latent_voxel=True  ->  c = inputs
    c = inputs

    # Host-side (plain XLA) fold of the tiny z/c projections and all biases into
    # one per-row bias:  bias_b = bp + bz + bc + z @ wz^T + c @ wc^T   (B, H)
    bias_b = (params["bp"] + params["bz"] + params["bc"]
              + z @ params["wz"].T
              + c @ params["wc"].T)
    bias_rows = jnp.repeat(bias_b, Tn, axis=0)                # (B*T, H)

    p2d = p.reshape(rows, DIM)
    slab = params["slab"]

    row_blocks = _row_blocks()
    if rows % (8 * row_blocks) != 0:
        row_blocks = 1
    rb = rows // row_blocks

    out = pl.pallas_call(
        decoder_kernel,
        out_shape=jax.ShapeDtypeStruct((rows, 1), jnp.float32),
        grid=(row_blocks,),
        in_specs=[
            pl.BlockSpec((rb, DIM), lambda r: (r, 0)),          # points (flattened)
            pl.BlockSpec((rb, H), lambda r: (r, 0)),            # folded per-row bias
            pl.BlockSpec((SLAB_ROWS, H), lambda r: (0, 0)),     # one parameter slab
        ],
        out_specs=pl.BlockSpec((rb, 1), lambda r: (r, 0)),
        compiler_params=pltpu.CompilerParams(
            dimension_semantics=("parallel",)),
    )(p2d, bias_rows, slab)

    logits = out[:, 0].reshape(Bsz, Tn)                        # (B, T)
    probs = jax.nn.sigmoid(logits)                             # Bernoulli(logits).probs
    return logits, probs


# ------------------------- parameter construction ---------------------------
def init_raw_params(key):
    ks = jax.random.split(key, 16)
    w = lambda k, shape, s: s * jax.random.normal(k, shape, jnp.float32)

    def bn_params(k, n):
        k1, k2, k3, k4 = jax.random.split(k, 4)
        g = 1.0 + 0.1 * jax.random.normal(k1, (n, H), jnp.float32)
        b = 0.1 * jax.random.normal(k2, (n, H), jnp.float32)
        m = 0.1 * jax.random.normal(k3, (n, H), jnp.float32)
        v = 1.0 + 0.1 * jnp.abs(jax.random.normal(k4, (n, H), jnp.float32))
        return g, b, m, v

    raw = {
        "wp": w(ks[0], (H, DIM), 0.3), "bp": w(ks[1], (1, H), 0.1),
        "wz": w(ks[2], (H, Z_DIM), 0.3), "bz": w(ks[3], (1, H), 0.1),
        "wc": w(ks[4], (H, C_DIM), 0.3), "bc": w(ks[5], (1, H), 0.1),
        "bw0": w(ks[6], (NBLK, H, H), 0.1),
        # fc_1 weights zero-initialized to match PyTorch ResnetBlockConv1d
        # (nn.init.zeros_(self.fc_1.weight)); biases stay random.
        "bw1": jnp.zeros((NBLK, H, H), jnp.float32),
        "bias0": 0.1 * jax.random.normal(ks[10], (NBLK, H), jnp.float32),
        "bias1": 0.1 * jax.random.normal(ks[11], (NBLK, H), jnp.float32),
        "bn0": bn_params(ks[8], NBLK),
        "bn1": bn_params(ks[9], NBLK),
        "bnf": bn_params(ks[12], 1),
        "wout": w(ks[13], (1, H), 0.3),
        "bout": w(ks[14], (1, 1), 0.1),
    }
    return raw


def pack_params(raw):
    """Host-side packing: transpose all weights, fold eval-mode BN into
    (scale, shift), and lay everything into one contiguous (SLAB_ROWS, H) slab."""
    def fold(bn):
        g, b, m, v = bn
        scale = g * jax.lax.rsqrt(v + EPS)
        shift = b - m * scale
        return scale, shift

    s0, t0 = fold(raw["bn0"])       # (NBLK, H)
    s1, t1 = fold(raw["bn1"])
    sf, tf = fold(raw["bnf"])       # (1, H)

    slab = jnp.zeros((SLAB_ROWS, H), jnp.float32)
    slab = slab.at[OFF_WPT:OFF_WPT + DIM].set(raw["wp"].T)
    for i in range(NBLK):
        wb = OFF_W + i * W_STRIDE
        vb = OFF_VEC + i * VEC_STRIDE
        slab = slab.at[wb:wb + H].set(raw["bw0"][i].T)
        slab = slab.at[wb + H:wb + 2 * H].set(raw["bw1"][i].T)
        slab = slab.at[vb + 0].set(s0[i])
        slab = slab.at[vb + 1].set(t0[i])
        slab = slab.at[vb + 2].set(s1[i])
        slab = slab.at[vb + 3].set(t1[i])
        slab = slab.at[vb + 4].set(raw["bias0"][i])
        slab = slab.at[vb + 5].set(raw["bias1"][i])
    slab = slab.at[OFF_FIN + 0].set(sf[0])
    slab = slab.at[OFF_FIN + 1].set(tf[0])
    slab = slab.at[OFF_FIN + 2].set(raw["wout"][0])
    slab = slab.at[OFF_FIN + 3, 0].set(raw["bout"][0, 0])

    return {
        "slab": slab,
        "wp": raw["wp"], "bp": raw["bp"],
        "wz": raw["wz"], "bz": raw["bz"],
        "wc": raw["wc"], "bc": raw["bc"],
    }


def decoder_reference(p, z, c, raw):
    """Pure-JAX reference of DecoderBatchNorm (eval-mode BN, channel-last)."""
    def bn(h, g, b, m, v):
        return (h - m) * g * jax.lax.rsqrt(v + EPS) + b

    net = (p @ raw["wp"].T + raw["bp"]
           + (z @ raw["wz"].T + raw["bz"])[:, None, :]
           + (c @ raw["wc"].T + raw["bc"])[:, None, :])        # (B, T, H)
    g0, b0, m0, v0 = raw["bn0"]
    g1, b1, m1, v1 = raw["bn1"]
    for i in range(NBLK):
        h = jnp.maximum(bn(net, g0[i], b0[i], m0[i], v0[i]), 0.0)
        h = h @ raw["bw0"][i].T + raw["bias0"][i]
        h = jnp.maximum(bn(h, g1[i], b1[i], m1[i], v1[i]), 0.0)
        net = net + h @ raw["bw1"][i].T + raw["bias1"][i]
    gf, bf, mf, vf = raw["bnf"]
    h = jnp.maximum(bn(net, gf[0], bf[0], mf[0], vf[0]), 0.0)
    return jnp.einsum("bth,h->bt", h, raw["wout"][0]) + raw["bout"][0, 0]


if __name__ == "__main__":
    key = jax.random.PRNGKey(0)
    kp, kin, kz, kparam = jax.random.split(key, 4)

    p = jax.random.normal(kp, (B, T, DIM), jnp.float32)        # sampled points
    inputs = jax.random.normal(kin, (B, C_DIM), jnp.float32)   # conditioning input
    # get_z_from_prior((B,), sample=True): z ~ N(0, I) of shape (B, Z_DIM)
    z = jax.random.normal(kz, (B, Z_DIM), jnp.float32)

    raw = init_raw_params(kparam)
    params = pack_params(raw)

    logits, probs = occupancy_network_forward(p, inputs, z, params)
    jax.block_until_ready((logits, probs))
    assert logits.shape == (B, T) and probs.shape == (B, T)

    # validate kernel + host-side folding/packing against a pure-JAX reference
    ref = decoder_reference(p, z, inputs, raw)
    err = float(jnp.max(jnp.abs(logits - ref)))
    tol = 5e-2 * float(jnp.maximum(1.0, jnp.max(jnp.abs(ref))))
    assert err < tol, f"max |logits - ref| = {err} (tol {tol})"

    print("KERNEL_OK")
</pallas_src>

<mosaic_0001>
module attributes {stable_mosaic.version = 11 : i64} {
  func.func @decoder_kernel(%arg0: i32, %arg1: memref<16x3xf32, #tpu.memory_space<vmem>>, %arg2: memref<16x32xf32, #tpu.memory_space<vmem>>, %arg3: memref<362x32xf32, #tpu.memory_space<vmem>>, %arg4: memref<16x1xf32, #tpu.memory_space<vmem>>) attributes {dimension_semantics = [#tpu.dimension_semantics<parallel>], iteration_bounds = array<i64: 1>, scalar_prefetch = 0 : i64, scratch_operands = 0 : i64, tpu.core_type = #tpu.core_type<tc>, window_params = [{transform_indices = @transform_0, window_bounds = array<i64: 16, 3>}, {transform_indices = @transform_1, window_bounds = array<i64: 16, 32>}, {pipeline_mode = #tpu.pipeline_mode<synchronous>, transform_indices = @transform_2, window_bounds = array<i64: 362, 32>}, {transform_indices = @transform_3, window_bounds = array<i64: 16, 1>}]} {
    %c0 = arith.constant 0 : index
    %c0_0 = arith.constant 0 : index
    %0 = vector.load %arg1[%c0, %c0_0] : memref<16x3xf32, #tpu.memory_space<vmem>>, vector<16x3xf32>
    %c0_1 = arith.constant 0 : index
    %c0_2 = arith.constant 0 : index
    %1 = vector.load %arg3[%c0_1, %c0_2] : memref<362x32xf32, #tpu.memory_space<vmem>>, vector<3x32xf32>
    %cst = arith.constant dense<0.000000e+00> : vector<16x32xf32>
    %2 = tpu.matmul %0, %1, %cst {dimension_numbers = #tpu.dot_dimension_numbers<[1], [0], [0], [1], [0, 0, 1, 1], [], []>} : vector<16x3xf32>, vector<3x32xf32>, vector<16x32xf32> -> vector<16x32xf32>
    %c0_3 = arith.constant 0 : index
    %c0_4 = arith.constant 0 : index
    %3 = vector.load %arg2[%c0_3, %c0_4] : memref<16x32xf32, #tpu.memory_space<vmem>>, vector<16x32xf32>
    %4 = arith.addf %2, %3 : vector<16x32xf32>
    %c328 = arith.constant 328 : index
    %c0_5 = arith.constant 0 : index
    %5 = vector.load %arg3[%c328, %c0_5] : memref<362x32xf32, #tpu.memory_space<vmem>>, vector<1x32xf32>
    %c329 = arith.constant 329 : index
    %c0_6 = arith.constant 0 : index
    %6 = vector.load %arg3[%c329, %c0_6] : memref<362x32xf32, #tpu.memory_space<vmem>>, vector<1x32xf32>
    %c330 = arith.constant 330 : index
    %c0_7 = arith.constant 0 : index
    %7 = vector.load %arg3[%c330, %c0_7] : memref<362x32xf32, #tpu.memory_space<vmem>>, vector<1x32xf32>
    %c331 = arith.constant 331 : index
    %c0_8 = arith.constant 0 : index
    %8 = vector.load %arg3[%c331, %c0_8] : memref<362x32xf32, #tpu.memory_space<vmem>>, vector<1x32xf32>
    %c332 = arith.constant 332 : index
    %c0_9 = arith.constant 0 : index
    %9 = vector.load %arg3[%c332, %c0_9] : memref<362x32xf32, #tpu.memory_space<vmem>>, vector<1x32xf32>
    %c333 = arith.constant 333 : index
    %c0_10 = arith.constant 0 : index
    %10 = vector.load %arg3[%c333, %c0_10] : memref<362x32xf32, #tpu.memory_space<vmem>>, vector<1x32xf32>
    %c8 = arith.constant 8 : index
    %c0_11 = arith.constant 0 : index
    %11 = vector.load %arg3[%c8, %c0_11] : memref<362x32xf32, #tpu.memory_space<vmem>>, vector<32x32xf32>
    %c40 = arith.constant 40 : index
    %c0_12 = arith.constant 0 : index
    %12 = vector.load %arg3[%c40, %c0_12] : memref<362x32xf32, #tpu.memory_space<vmem>>, vector<32x32xf32>
    %13 = vector.broadcast %5 : vector<1x32xf32> to vector<16x32xf32>
    %14 = arith.mulf %4, %13 : vector<16x32xf32>
    %15 = vector.broadcast %6 : vector<1x32xf32> to vector<16x32xf32>
    %16 = arith.addf %14, %15 : vector<16x32xf32>
    %cst_13 = arith.constant 0.000000e+00 : f32
    %17 = vector.broadcast %cst_13 : f32 to vector<16x32xf32>
    %18 = arith.maximumf %16, %17 : vector<16x32xf32>
    %cst_14 = arith.constant dense<0.000000e+00> : vector<16x32xf32>
    %19 = tpu.matmul %18, %11, %cst_14 {dimension_numbers = #tpu.dot_dimension_numbers<[1], [0], [0], [1], [0, 0, 1, 1], [], []>} : vector<16x32xf32>, vector<32x32xf32>, vector<16x32xf32> -> vector<16x32xf32>
    %20 = vector.broadcast %9 : vector<1x32xf32> to vector<16x32xf32>
    %21 = arith.addf %19, %20 : vector<16x32xf32>
    %22 = vector.broadcast %7 : vector<1x32xf32> to vector<16x32xf32>
    %23 = arith.mulf %21, %22 : vector<16x32xf32>
    %24 = vector.broadcast %8 : vector<1x32xf32> to vector<16x32xf32>
    %25 = arith.addf %23, %24 : vector<16x32xf32>
    %cst_15 = arith.constant 0.000000e+00 : f32
    %26 = vector.broadcast %cst_15 : f32 to vector<16x32xf32>
    %27 = arith.maximumf %25, %26 : vector<16x32xf32>
    %cst_16 = arith.constant dense<0.000000e+00> : vector<16x32xf32>
    %28 = tpu.matmul %27, %12, %cst_16 {dimension_numbers = #tpu.dot_dimension_numbers<[1], [0], [0], [1], [0, 0, 1, 1], [], []>} : vector<16x32xf32>, vector<32x32xf32>, vector<16x32xf32> -> vector<16x32xf32>
    %29 = arith.addf %4, %28 : vector<16x32xf32>
    %30 = vector.broadcast %10 : vector<1x32xf32> to vector<16x32xf32>
    %31 = arith.addf %29, %30 : vector<16x32xf32>
    %c334 = arith.constant 334 : index
    %c0_17 = arith.constant 0 : index
    %32 = vector.load %arg3[%c334, %c0_17] : memref<362x32xf32, #tpu.memory_space<vmem>>, vector<1x32xf32>
    %c335 = arith.constant 335 : index
    %c0_18 = arith.constant 0 : index
    %33 = vector.load %arg3[%c335, %c0_18] : memref<362x32xf32, #tpu.memory_space<vmem>>, vector<1x32xf32>
    %c336 = arith.constant 336 : index
    %c0_19 = arith.constant 0 : index
    %34 = vector.load %arg3[%c336, %c0_19] : memref<362x32xf32, #tpu.memory_space<vmem>>, vector<1x32xf32>
    %c337 = arith.constant 337 : index
    %c0_20 = arith.constant 0 : index
    %35 = vector.load %arg3[%c337, %c0_20] : memref<362x32xf32, #tpu.memory_space<vmem>>, vector<1x32xf32>
    %c338 = arith.constant 338 : index
    %c0_21 = arith.constant 0 : index
    %36 = vector.load %arg3[%c338, %c0_21] : memref<362x32xf32, #tpu.memory_space<vmem>>, vector<1x32xf32>
    %c339 = arith.constant 339 : index
    %c0_22 = arith.constant 0 : index
    %37 = vector.load %arg3[%c339, %c0_22] : memref<362x32xf32, #tpu.memory_space<vmem>>, vector<1x32xf32>
    %c72 = arith.constant 72 : index
    %c0_23 = arith.constant 0 : index
    %38 = vector.load %arg3[%c72, %c0_23] : memref<362x32xf32, #tpu.memory_space<vmem>>, vector<32x32xf32>
    %c104 = arith.constant 104 : index
    %c0_24 = arith.constant 0 : index
    %39 = vector.load %arg3[%c104, %c0_24] : memref<362x32xf32, #tpu.memory_space<vmem>>, vector<32x32xf32>
    %40 = vector.broadcast %32 : vector<1x32xf32> to vector<16x32xf32>
    %41 = arith.mulf %31, %40 : vector<16x32xf32>
    %42 = vector.broadcast %33 : vector<1x32xf32> to vector<16x32xf32>
    %43 = arith.addf %41, %42 : vector<16x32xf32>
    %cst_25 = arith.constant 0.000000e+00 : f32
    %44 = vector.broadcast %cst_25 : f32 to vector<16x32xf32>
    %45 = arith.maximumf %43, %44 : vector<16x32xf32>
    %cst_26 = arith.constant dense<0.000000e+00> : vector<16x32xf32>
    %46 = tpu.matmul %45, %38, %cst_26 {dimension_numbers = #tpu.dot_dimension_numbers<[1], [0], [0], [1], [0, 0, 1, 1], [], []>} : vector<16x32xf32>, vector<32x32xf32>, vector<16x32xf32> -> vector<16x32xf32>
    %47 = vector.broadcast %36 : vector<1x32xf32> to vector<16x32xf32>
    %48 = arith.addf %46, %47 : vector<16x32xf32>
    %49 = vector.broadcast %34 : vector<1x32xf32> to vector<16x32xf32>
    %50 = arith.mulf %48, %49 : vector<16x32xf32>
    %51 = vector.broadcast %35 : vector<1x32xf32> to vector<16x32xf32>
    %52 = arith.addf %50, %51 : vector<16x32xf32>
    %cst_27 = arith.constant 0.000000e+00 : f32
    %53 = vector.broadcast %cst_27 : f32 to vector<16x32xf32>
    %54 = arith.maximumf %52, %53 : vector<16x32xf32>
    %cst_28 = arith.constant dense<0.000000e+00> : vector<16x32xf32>
    %55 = tpu.matmul %54, %39, %cst_28 {dimension_numbers = #tpu.dot_dimension_numbers<[1], [0], [0], [1], [0, 0, 1, 1], [], []>} : vector<16x32xf32>, vector<32x32xf32>, vector<16x32xf32> -> vector<16x32xf32>
    %56 = arith.addf %31, %55 : vector<16x32xf32>
    %57 = vector.broadcast %37 : vector<1x32xf32> to vector<16x32xf32>
    %58 = arith.addf %56, %57 : vector<16x32xf32>
    %c340 = arith.constant 340 : index
    %c0_29 = arith.constant 0 : index
    %59 = vector.load %arg3[%c340, %c0_29] : memref<362x32xf32, #tpu.memory_space<vmem>>, vector<1x32xf32>
    %c341 = arith.constant 341 : index
    %c0_30 = arith.constant 0 : index
    %60 = vector.load %arg3[%c341, %c0_30] : memref<362x32xf32, #tpu.memory_space<vmem>>, vector<1x32xf32>
    %c342 = arith.constant 342 : index
    %c0_31 = arith.constant 0 : index
    %61 = vector.load %arg3[%c342, %c0_31] : memref<362x32xf32, #tpu.memory_space<vmem>>, vector<1x32xf32>
    %c343 = arith.constant 343 : index
    %c0_32 = arith.constant 0 : index
    %62 = vector.load %arg3[%c343, %c0_32] : memref<362x32xf32, #tpu.memory_space<vmem>>, vector<1x32xf32>
    %c344 = arith.constant 344 : index
    %c0_33 = arith.constant 0 : index
    %63 = vector.load %arg3[%c344, %c0_33] : memref<362x32xf32, #tpu.memory_space<vmem>>, vector<1x32xf32>
    %c345 = arith.constant 345 : index
    %c0_34 = arith.constant 0 : index
    %64 = vector.load %arg3[%c345, %c0_34] : memref<362x32xf32, #tpu.memory_space<vmem>>, vector<1x32xf32>
    %c136 = arith.constant 136 : index
    %c0_35 = arith.constant 0 : index
    %65 = vector.load %arg3[%c136, %c0_35] : memref<362x32xf32, #tpu.memory_space<vmem>>, vector<32x32xf32>
    %c168 = arith.constant 168 : index
    %c0_36 = arith.constant 0 : index
    %66 = vector.load %arg3[%c168, %c0_36] : memref<362x32xf32, #tpu.memory_space<vmem>>, vector<32x32xf32>
    %67 = vector.broadcast %59 : vector<1x32xf32> to vector<16x32xf32>
    %68 = arith.mulf %58, %67 : vector<16x32xf32>
    %69 = vector.broadcast %60 : vector<1x32xf32> to vector<16x32xf32>
    %70 = arith.addf %68, %69 : vector<16x32xf32>
    %cst_37 = arith.constant 0.000000e+00 : f32
    %71 = vector.broadcast %cst_37 : f32 to vector<16x32xf32>
    %72 = arith.maximumf %70, %71 : vector<16x32xf32>
    %cst_38 = arith.constant dense<0.000000e+00> : vector<16x32xf32>
    %73 = tpu.matmul %72, %65, %cst_38 {dimension_numbers = #tpu.dot_dimension_numbers<[1], [0], [0], [1], [0, 0, 1, 1], [], []>} : vector<16x32xf32>, vector<32x32xf32>, vector<16x32xf32> -> vector<16x32xf32>
    %74 = vector.broadcast %63 : vector<1x32xf32> to vector<16x32xf32>
    %75 = arith.addf %73, %74 : vector<16x32xf32>
    %76 = vector.broadcast %61 : vector<1x32xf32> to vector<16x32xf32>
    %77 = arith.mulf %75, %76 : vector<16x32xf32>
    %78 = vector.broadcast %62 : vector<1x32xf32> to vector<16x32xf32>
    %79 = arith.addf %77, %78 : vector<16x32xf32>
    %cst_39 = arith.constant 0.000000e+00 : f32
    %80 = vector.broadcast %cst_39 : f32 to vector<16x32xf32>
    %81 = arith.maximumf %79, %80 : vector<16x32xf32>
    %cst_40 = arith.constant dense<0.000000e+00> : vector<16x32xf32>
    %82 = tpu.matmul %81, %66, %cst_40 {dimension_numbers = #tpu.dot_dimension_numbers<[1], [0], [0], [1], [0, 0, 1, 1], [], []>} : vector<16x32xf32>, vector<32x32xf32>, vector<16x32xf32> -> vector<16x32xf32>
    %83 = arith.addf %58, %82 : vector<16x32xf32>
    %84 = vector.broadcast %64 : vector<1x32xf32> to vector<16x32xf32>
    %85 = arith.addf %83, %84 : vector<16x32xf32>
    %c346 = arith.constant 346 : index
    %c0_41 = arith.constant 0 : index
    %86 = vector.load %arg3[%c346, %c0_41] : memref<362x32xf32, #tpu.memory_space<vmem>>, vector<1x32xf32>
    %c347 = arith.constant 347 : index
    %c0_42 = arith.constant 0 : index
    %87 = vector.load %arg3[%c347, %c0_42] : memref<362x32xf32, #tpu.memory_space<vmem>>, vector<1x32xf32>
    %c348 = arith.constant 348 : index
    %c0_43 = arith.constant 0 : index
    %88 = vector.load %arg3[%c348, %c0_43] : memref<362x32xf32, #tpu.memory_space<vmem>>, vector<1x32xf32>
    %c349 = arith.constant 349 : index
    %c0_44 = arith.constant 0 : index
    %89 = vector.load %arg3[%c349, %c0_44] : memref<362x32xf32, #tpu.memory_space<vmem>>, vector<1x32xf32>
    %c350 = arith.constant 350 : index
    %c0_45 = arith.constant 0 : index
    %90 = vector.load %arg3[%c350, %c0_45] : memref<362x32xf32, #tpu.memory_space<vmem>>, vector<1x32xf32>
    %c351 = arith.constant 351 : index
    %c0_46 = arith.constant 0 : index
    %91 = vector.load %arg3[%c351, %c0_46] : memref<362x32xf32, #tpu.memory_space<vmem>>, vector<1x32xf32>
    %c200 = arith.constant 200 : index
    %c0_47 = arith.constant 0 : index
    %92 = vector.load %arg3[%c200, %c0_47] : memref<362x32xf32, #tpu.memory_space<vmem>>, vector<32x32xf32>
    %c232 = arith.constant 232 : index
    %c0_48 = arith.constant 0 : index
    %93 = vector.load %arg3[%c232, %c0_48] : memref<362x32xf32, #tpu.memory_space<vmem>>, vector<32x32xf32>
    %94 = vector.broadcast %86 : vector<1x32xf32> to vector<16x32xf32>
    %95 = arith.mulf %85, %94 : vector<16x32xf32>
    %96 = vector.broadcast %87 : vector<1x32xf32> to vector<16x32xf32>
    %97 = arith.addf %95, %96 : vector<16x32xf32>
    %cst_49 = arith.constant 0.000000e+00 : f32
    %98 = vector.broadcast %cst_49 : f32 to vector<16x32xf32>
    %99 = arith.maximumf %97, %98 : vector<16x32xf32>
    %cst_50 = arith.constant dense<0.000000e+00> : vector<16x32xf32>
    %100 = tpu.matmul %99, %92, %cst_50 {dimension_numbers = #tpu.dot_dimension_numbers<[1], [0], [0], [1], [0, 0, 1, 1], [], []>} : vector<16x32xf32>, vector<32x32xf32>, vector<16x32xf32> -> vector<16x32xf32>
    %101 = vector.broadcast %90 : vector<1x32xf32> to vector<16x32xf32>
    %102 = arith.addf %100, %101 : vector<16x32xf32>
    %103 = vector.broadcast %88 : vector<1x32xf32> to vector<16x32xf32>
    %104 = arith.mulf %102, %103 : vector<16x32xf32>
    %105 = vector.broadcast %89 : vector<1x32xf32> to vector<16x32xf32>
    %106 = arith.addf %104, %105 : vector<16x32xf32>
    %cst_51 = arith.constant 0.000000e+00 : f32
    %107 = vector.broadcast %cst_51 : f32 to vector<16x32xf32>
    %108 = arith.maximumf %106, %107 : vector<16x32xf32>
    %cst_52 = arith.constant dense<0.000000e+00> : vector<16x32xf32>
    %109 = tpu.matmul %108, %93, %cst_52 {dimension_numbers = #tpu.dot_dimension_numbers<[1], [0], [0], [1], [0, 0, 1, 1], [], []>} : vector<16x32xf32>, vector<32x32xf32>, vector<16x32xf32> -> vector<16x32xf32>
    %110 = arith.addf %85, %109 : vector<16x32xf32>
    %111 = vector.broadcast %91 : vector<1x32xf32> to vector<16x32xf32>
    %112 = arith.addf %110, %111 : vector<16x32xf32>
    %c352 = arith.constant 352 : index
    %c0_53 = arith.constant 0 : index
    %113 = vector.load %arg3[%c352, %c0_53] : memref<362x32xf32, #tpu.memory_space<vmem>>, vector<1x32xf32>
    %c353 = arith.constant 353 : index
    %c0_54 = arith.constant 0 : index
    %114 = vector.load %arg3[%c353, %c0_54] : memref<362x32xf32, #tpu.memory_space<vmem>>, vector<1x32xf32>
    %c354 = arith.constant 354 : index
    %c0_55 = arith.constant 0 : index
    %115 = vector.load %arg3[%c354, %c0_55] : memref<362x32xf32, #tpu.memory_space<vmem>>, vector<1x32xf32>
    %c355 = arith.constant 355 : index
    %c0_56 = arith.constant 0 : index
    %116 = vector.load %arg3[%c355, %c0_56] : memref<362x32xf32, #tpu.memory_space<vmem>>, vector<1x32xf32>
    %c356 = arith.constant 356 : index
    %c0_57 = arith.constant 0 : index
    %117 = vector.load %arg3[%c356, %c0_57] : memref<362x32xf32, #tpu.memory_space<vmem>>, vector<1x32xf32>
    %c357 = arith.constant 357 : index
    %c0_58 = arith.constant 0 : index
    %118 = vector.load %arg3[%c357, %c0_58] : memref<362x32xf32, #tpu.memory_space<vmem>>, vector<1x32xf32>
    %c264 = arith.constant 264 : index
    %c0_59 = arith.constant 0 : index
    %119 = vector.load %arg3[%c264, %c0_59] : memref<362x32xf32, #tpu.memory_space<vmem>>, vector<32x32xf32>
    %c296 = arith.constant 296 : index
    %c0_60 = arith.constant 0 : index
    %120 = vector.load %arg3[%c296, %c0_60] : memref<362x32xf32, #tpu.memory_space<vmem>>, vector<32x32xf32>
    %121 = vector.broadcast %113 : vector<1x32xf32> to vector<16x32xf32>
    %122 = arith.mulf %112, %121 : vector<16x32xf32>
    %123 = vector.broadcast %114 : vector<1x32xf32> to vector<16x32xf32>
    %124 = arith.addf %122, %123 : vector<16x32xf32>
    %cst_61 = arith.constant 0.000000e+00 : f32
    %125 = vector.broadcast %cst_61 : f32 to vector<16x32xf32>
    %126 = arith.maximumf %124, %125 : vector<16x32xf32>
    %cst_62 = arith.constant dense<0.000000e+00> : vector<16x32xf32>
    %127 = tpu.matmul %126, %119, %cst_62 {dimension_numbers = #tpu.dot_dimension_numbers<[1], [0], [0], [1], [0, 0, 1, 1], [], []>} : vector<16x32xf32>, vector<32x32xf32>, vector<16x32xf32> -> vector<16x32xf32>
    %128 = vector.broadcast %117 : vector<1x32xf32> to vector<16x32xf32>
    %129 = arith.addf %127, %128 : vector<16x32xf32>
    %130 = vector.broadcast %115 : vector<1x32xf32> to vector<16x32xf32>
    %131 = arith.mulf %129, %130 : vector<16x32xf32>
    %132 = vector.broadcast %116 : vector<1x32xf32> to vector<16x32xf32>
    %133 = arith.addf %131, %132 : vector<16x32xf32>
    %cst_63 = arith.constant 0.000000e+00 : f32
    %134 = vector.broadcast %cst_63 : f32 to vector<16x32xf32>
    %135 = arith.maximumf %133, %134 : vector<16x32xf32>
    %cst_64 = arith.constant dense<0.000000e+00> : vector<16x32xf32>
    %136 = tpu.matmul %135, %120, %cst_64 {dimension_numbers = #tpu.dot_dimension_numbers<[1], [0], [0], [1], [0, 0, 1, 1], [], []>} : vector<16x32xf32>, vector<32x32xf32>, vector<16x32xf32> -> vector<16x32xf32>
    %137 = arith.addf %112, %136 : vector<16x32xf32>
    %138 = vector.broadcast %118 : vector<1x32xf32> to vector<16x32xf32>
    %139 = arith.addf %137, %138 : vector<16x32xf32>
    %c358 = arith.constant 358 : index
    %c0_65 = arith.constant 0 : index
    %140 = vector.load %arg3[%c358, %c0_65] : memref<362x32xf32, #tpu.memory_space<vmem>>, vector<1x32xf32>
    %c359 = arith.constant 359 : index
    %c0_66 = arith.constant 0 : index
    %141 = vector.load %arg3[%c359, %c0_66] : memref<362x32xf32, #tpu.memory_space<vmem>>, vector<1x32xf32>
    %c360 = arith.constant 360 : index
    %c0_67 = arith.constant 0 : index
    %142 = vector.load %arg3[%c360, %c0_67] : memref<362x32xf32, #tpu.memory_space<vmem>>, vector<1x32xf32>
    %c361 = arith.constant 361 : index
    %c0_68 = arith.constant 0 : index
    %143 = vector.load %arg3[%c361, %c0_68] : memref<362x32xf32, #tpu.memory_space<vmem>>, vector<1x1xf32>
    %144 = vector.broadcast %140 : vector<1x32xf32> to vector<16x32xf32>
    %145 = arith.mulf %139, %144 : vector<16x32xf32>
    %146 = vector.broadcast %141 : vector<1x32xf32> to vector<16x32xf32>
    %147 = arith.addf %145, %146 : vector<16x32xf32>
    %cst_69 = arith.constant 0.000000e+00 : f32
    %148 = vector.broadcast %cst_69 : f32 to vector<16x32xf32>
    %149 = arith.maximumf %147, %148 : vector<16x32xf32>
    %150 = vector.broadcast %142 : vector<1x32xf32> to vector<16x32xf32>
    %151 = arith.mulf %149, %150 : vector<16x32xf32>
    %cst_70 = arith.constant dense<0.000000e+00> : vector<16xf32>
    %152 = vector.multi_reduction <add>, %151, %cst_70 [1] : vector<16x32xf32> to vector<16xf32>
    %153 = vector.shape_cast %152 : vector<16xf32> to vector<16x1xf32>
    %154 = vector.broadcast %143 : vector<1x1xf32> to vector<16x1xf32>
    %155 = arith.addf %153, %154 : vector<16x1xf32>
    %c0_71 = arith.constant 0 : index
    %c0_72 = arith.constant 0 : index
    %156 = vector.load %arg4[%c0_71, %c0_72] : memref<16x1xf32, #tpu.memory_space<vmem>>, vector<16x1xf32>
    tpu.vector_store %arg4[%c0_71, %c0_72], %155 {strides = array<i32>} : memref<16x1xf32, #tpu.memory_space<vmem>>, vector<16x1xf32>,
    return
  }
  func.func @transform_0(%arg0: i32) -> (i32, i32) {
    %c0_i32 = arith.constant 0 : i32
    %c0_i32_0 = arith.constant 0 : i32
    return %arg0, %c0_i32 : i32, i32
  }
  func.func @transform_1(%arg0: i32) -> (i32, i32) {
    %c0_i32 = arith.constant 0 : i32
    %c0_i32_0 = arith.constant 0 : i32
    return %arg0, %c0_i32 : i32, i32
  }
  func.func @transform_2(%arg0: i32) -> (i32, i32) {
    %c0_i32 = arith.constant 0 : i32
    %c0_i32_0 = arith.constant 0 : i32
    %c0_i32_1 = arith.constant 0 : i32
    return %c0_i32, %c0_i32_0 : i32, i32
  }
  func.func @transform_3(%arg0: i32) -> (i32, i32) {
    %c0_i32 = arith.constant 0 : i32
    %c0_i32_0 = arith.constant 0 : i32
    return %arg0, %c0_i32 : i32, i32
  }
}

</mosaic_0001>

<llo_original>
// kernel: tpu_custom_call.1
$region0: #{tpu_custom_call.1}
  #allocation0 [shape = 'u32[]', space=smem, size = 0x4, offset = 0x4, fixed_abs, tag = 'smem constant byte address 0x4 - core index']
  #allocation1 [shape = 'u32[144,128]{1,0:T(1,128)}', space=vmem, size = 0x12000, scoped, tag = 'internal scratch']
  %s0 = inlined_call_operand.vmem [shape: f32[16,3], index: 0, kind: input, shape index: {}]
  %s1 = inlined_call_operand.vmem [shape: f32[16,32], index: 1, kind: input, shape index: {}]
  %s2 = inlined_call_operand.vmem [shape: f32[362,32], index: 2, kind: input, shape index: {}]
  %s3 = inlined_call_operand.vmem [shape: f32[16,1], index: 3, kind: output, shape index: {}]
  %s4 = sld [smem:[#allocation0]]
  $region22: #{tpu_custom_call.1} parent=0
    _
  %s6 = ssub.s32 1, %s4
  %s7 = scalar_select 0, %s6, %s4
  // Predicated region
  $region2: #{tpu_custom_call.1} parent=0 // pred_check
    _
  $region3: #{tpu_custom_call.1} parent=0 // pred_check_branch
    %9 = sbr.rel (0) target = $region5
  $region4: #{tpu_custom_call.1} parent=0 // pred_region
    _
  $region5: #{tpu_custom_call.1} parent=0 // pred_fallthru
    _
  // Predicated region
  $region6: #{tpu_custom_call.1} parent=0 // pred_check
    _
  $region7: #{tpu_custom_call.1} parent=0 // pred_check_branch
    %11 = sbr.rel (0) target = $region9
  $region8: #{tpu_custom_call.1} parent=0 // pred_region
    _
  $region9: #{tpu_custom_call.1} parent=0 // pred_fallthru
    _
  // Predicated region
  $region10: #{tpu_custom_call.1} parent=0 // pred_check
    _
  $region11: #{tpu_custom_call.1} parent=0 // pred_check_branch
    %13 = sbr.rel (0) target = $region13
  $region12: #{tpu_custom_call.1} parent=0 // pred_region
    _
  $region13: #{tpu_custom_call.1} parent=0 // pred_fallthru
    _
  %v14 = vld [vmem:[%s0] sm:$0xff]
  %v15 = vld [vmem:[%s0 + $0x8] sm:$0xff]
  %v16 = vld [vmem:[%s2] sm:$0x7]
  %v17 = vld [vmem:[%s1] sm:$0xff]
  %v18 = vld [vmem:[%s1 + $0x8] sm:$0xff]
  %vm19 = vcmask 23552
  %v21 = vsel %vm19, %v14, 0
  %v24 = vsel %vm19, %v15, 0
  %vm26 = vcmask 1042432
  %v28 = vsel %vm26, %v16, 0
  %30 = vmatprep.subr.mxu0 0.0
  %31 = vmatpush1.msra.mxu0 0.0
  %32 = vmatprep.subr.mxu0 0.0
  %33 = vmatpush1.msra.mxu0 0.0
  %34 = vmatprep.subr.mxu0 0.0
  %35 = vmatpush1.msra.mxu0 0.0
  %36 = vmatprep.subr.mxu0 0.0
  %37 = vmatpush1.msra.mxu0 0.0
  %38 = vmatprep.subr.mxu0 0.0
  %39 = vmatpush1.msra.mxu0 0.0
  %40 = vmatprep.subr.mxu0 0.0
  %41 = vmatpush1.msra.mxu0 0.0
  %42 = vmatprep.subr.mxu0 0.0
  %43 = vmatpush1.msra.mxu0 0.0
  %44 = vmatprep.subr.mxu0 0.0
  %45 = vmatpush1.msra.mxu0 0.0
  %46 = vmatprep.subr.mxu0 0.0
  %47 = vmatpush1.msra.mxu0 0.0
  %48 = vmatprep.subr.mxu0 0.0
  %49 = vmatpush1.msra.mxu0 0.0
  %50 = vmatprep.subr.mxu0 0.0
  %51 = vmatpush1.msra.mxu0 0.0
  %52 = vmatprep.subr.mxu0 0.0
  %53 = vmatpush1.msra.mxu0 0.0
  %54 = vmatprep.subr.mxu0 0.0
  %55 = vmatpush1.msra.mxu0 0.0
  %56 = vmatprep.subr.mxu0 0.0
  %57 = vmatpush1.msra.mxu0 0.0
  %58 = vmatprep.subr.mxu0 0.0
  %59 = vmatpush1.msra.mxu0 0.0
  %60 = vmatprep.subr.mxu0 0.0
  %61 = vmatpush1.msra.mxu0 %v28
  %62 = vmatprep.subr.mxu0 0.0
  %63 = vmatpush2.msra.mxu0 0.0
  %64 = vmatprep.subr.mxu0 0.0
  %65 = vmatpush2.msra.mxu0 0.0
  %66 = vmatprep.subr.mxu0 0.0
  %67 = vmatpush2.msra.mxu0 0.0
  %68 = vmatprep.subr.mxu0 0.0
  %69 = vmatpush2.msra.mxu0 0.0
  %70 = vmatprep.subr.mxu0 0.0
  %71 = vmatpush2.msra.mxu0 0.0
  %72 = vmatprep.subr.mxu0 0.0
  %73 = vmatpush2.msra.mxu0 0.0
  %74 = vmatprep.subr.mxu0 0.0
  %75 = vmatpush2.msra.mxu0 0.0
  %76 = vmatprep.subr.mxu0 0.0
  %77 = vmatpush2.msra.mxu0 0.0
  %78 = vmatprep.subr.mxu0 0.0
  %79 = vmatpush2.msra.mxu0 0.0
  %80 = vmatprep.subr.mxu0 0.0
  %81 = vmatpush2.msra.mxu0 0.0
  %82 = vmatprep.subr.mxu0 0.0
  %83 = vmatpush2.msra.mxu0 0.0
  %84 = vmatprep.subr.mxu0 0.0
  %85 = vmatpush2.msra.mxu0 0.0
  %86 = vmatprep.subr.mxu0 0.0
  %87 = vmatpush2.msra.mxu0 0.0
  %88 = vmatprep.subr.mxu0 0.0
  %89 = vmatpush2.msra.mxu0 0.0
  %90 = vmatprep.subr.mxu0 0.0
  %91 = vmatpush2.msra.mxu0 0.0
  %92 = vmatprep.subr.mxu0 0.0
  %93 = vmatpush2.msra.mxu0 0.0
  %94 = vmatprep.mubr.f32.mxu0 0.0
  %95 = vmatmul.mubr.f32.gmra.mxu0 %v21
  %v96 = vpop.f32.mrf.mxu0
  %v97 = vadd.f32 %v17, %v96
  %v98 = vpop.f32.mrf.mxu0
  %99 = vmatprep.mubr.f32.mxu0 0.0
  %100 = vmatmul.mubr.f32.gmra.mxu0 %v24
  %v101 = vpop.f32.mrf.mxu0
  %v102 = vadd.f32 %v18, %v101
  %v103 = vpop.f32.mrf.mxu0
  %104 = vdwg.mxu0
  %v105 = vld [vmem:[%s2 + $0x148] sm:$0x1]
  %v106 = vld [vmem:[%s2 + $0x149] sm:$0x1]
  %v107 = vld [vmem:[%s2 + $0x14a] sm:$0x1]
  %v108 = vld [vmem:[%s2 + $0x14b] sm:$0x1]
  %v109 = vld [vmem:[%s2 + $0x14c] sm:$0x1]
  %v110 = vld [vmem:[%s2 + $0x14d] sm:$0x1]
  %v111 = vld [vmem:[%s2 + $0x8] sm:$0xff]
  %v112 = vld [vmem:[%s2 + $0x10] sm:$0xff]
  %v113 = vld [vmem:[%s2 + $0x18] sm:$0xff]
  %v114 = vld [vmem:[%s2 + $0x20] sm:$0xff]
  %v115 = vld [vmem:[%s2 + $0x28] sm:$0xff]
  %v116 = vld [vmem:[%s2 + $0x30] sm:$0xff]
  %v117 = vld [vmem:[%s2 + $0x38] sm:$0xff]
  %v118 = vld [vmem:[%s2 + $0x40] sm:$0xff]
  %v119 = vlaneseq
  %v120 = vshrl.u32 %v119, 7
  %v121 = vsub.s32 0, %v120
  %v122 = vrot.slane %v105, %v121
  %v123 = vmul.f32 %v97, %v122
  %v124 = vmul.f32 %v102, %v122
  %v125 = vlaneseq
  %v126 = vshrl.u32 %v125, 7
  %v127 = vsub.s32 0, %v126
  %v128 = vrot.slane %v106, %v127
  %v129 = vadd.f32 %v123, %v128
  %v130 = vadd.f32 %v124, %v128
  %v131 = vmax.f32 %v129, 0.0
  %v132 = vmax.f32 %v130, 0.0
  %v133 = vlaneseq
  %v134 = vshrl.u32 %v133, 7
  %v135 = vsub.s32 0, %v134
  %v136 = vrot.slane %v109, %v135
  %vm137 = vcmask 261120
  %v139 = vsel %vm137, %v131, 0
  %v142 = vsel %vm137, %v132, 0
  %144 = vmatprep.subr.mxu0 0.0
  %145 = vmatpush1.msra.mxu0 0.0
  %146 = vmatprep.subr.mxu0 0.0
  %147 = vmatpush1.msra.mxu0 0.0
  %148 = vmatprep.subr.mxu0 0.0
  %149 = vmatpush1.msra.mxu0 0.0
  %150 = vmatprep.subr.mxu0 0.0
  %151 = vmatpush1.msra.mxu0 0.0
  %152 = vmatprep.subr.mxu0 0.0
  %153 = vmatpush1.msra.mxu0 0.0
  %154 = vmatprep.subr.mxu0 0.0
  %155 = vmatpush1.msra.mxu0 0.0
  %156 = vmatprep.subr.mxu0 0.0
  %157 = vmatpush1.msra.mxu0 0.0
  %158 = vmatprep.subr.mxu0 0.0
  %159 = vmatpush1.msra.mxu0 0.0
  %160 = vmatprep.subr.mxu0 0.0
  %161 = vmatpush1.msra.mxu0 0.0
  %162 = vmatprep.subr.mxu0 0.0
  %163 = vmatpush1.msra.mxu0 0.0
  %164 = vmatprep.subr.mxu0 0.0
  %165 = vmatpush1.msra.mxu0 0.0
  %166 = vmatprep.subr.mxu0 0.0
  %167 = vmatpush1.msra.mxu0 0.0
  %168 = vmatprep.subr.mxu0 0.0
  %169 = vmatpush1.msra.mxu0 %v114
  %170 = vmatprep.subr.mxu0 0.0
  %171 = vmatpush1.msra.mxu0 %v113
  %172 = vmatprep.subr.mxu0 0.0
  %173 = vmatpush1.msra.mxu0 %v112
  %174 = vmatprep.subr.mxu0 0.0
  %175 = vmatpush1.msra.mxu0 %v111
  %176 = vmatprep.subr.mxu0 0.0
  %177 = vmatpush2.msra.mxu0 0.0
  %178 = vmatprep.subr.mxu0 0.0
  %179 = vmatpush2.msra.mxu0 0.0
  %180 = vmatprep.subr.mxu0 0.0
  %181 = vmatpush2.msra.mxu0 0.0
  %182 = vmatprep.subr.mxu0 0.0
  %183 = vmatpush2.msra.mxu0 0.0
  %184 = vmatprep.subr.mxu0 0.0
  %185 = vmatpush2.msra.mxu0 0.0
  %186 = vmatprep.subr.mxu0 0.0
  %187 = vmatpush2.msra.mxu0 0.0
  %188 = vmatprep.subr.mxu0 0.0
  %189 = vmatpush2.msra.mxu0 0.0
  %190 = vmatprep.subr.mxu0 0.0
  %191 = vmatpush2.msra.mxu0 0.0
  %192 = vmatprep.subr.mxu0 0.0
  %193 = vmatpush2.msra.mxu0 0.0
  %194 = vmatprep.subr.mxu0 0.0
  %195 = vmatpush2.msra.mxu0 0.0
  %196 = vmatprep.subr.mxu0 0.0
  %197 = vmatpush2.msra.mxu0 0.0
  %198 = vmatprep.subr.mxu0 0.0
  %199 = vmatpush2.msra.mxu0 0.0
  %200 = vmatprep.subr.mxu0 0.0
  %201 = vmatpush2.msra.mxu0 0.0
  %202 = vmatprep.subr.mxu0 0.0
  %203 = vmatpush2.msra.mxu0 0.0
  %204 = vmatprep.subr.mxu0 0.0
  %205 = vmatpush2.msra.mxu0 0.0
  %206 = vmatprep.subr.mxu0 0.0
  %207 = vmatpush2.msra.mxu0 0.0
  %208 = vmatprep.mubr.f32.mxu0 0.0
  %209 = vmatmul.mubr.f32.gmra.mxu0 %v139
  %v210 = vpop.f32.mrf.mxu0
  %v211 = vadd.f32 %v136, %v210
  %v212 = vpop.f32.mrf.mxu0
  %213 = vmatprep.mubr.f32.mxu0 0.0
  %214 = vmatmul.mubr.f32.gmra.mxu0 %v142
  %v215 = vpop.f32.mrf.mxu0
  %v216 = vadd.f32 %v136, %v215
  %v217 = vpop.f32.mrf.mxu0
  %218 = vdwg.mxu0
  %v219 = vlaneseq
  %v220 = vshrl.u32 %v219, 7
  %v221 = vsub.s32 0, %v220
  %v222 = vrot.slane %v107, %v221
  %v223 = vmul.f32 %v211, %v222
  %v224 = vmul.f32 %v216, %v222
  %v225 = vlaneseq
  %v226 = vshrl.u32 %v225, 7
  %v227 = vsub.s32 0, %v226
  %v228 = vrot.slane %v108, %v227
  %v229 = vadd.f32 %v223, %v228
  %v230 = vadd.f32 %v224, %v228
  %v231 = vmax.f32 %v229, 0.0
  %v232 = vmax.f32 %v230, 0.0
  %v234 = vsel %vm137, %v231, 0
  %v237 = vsel %vm137, %v232, 0
  %239 = vmatprep.subr.mxu0 0.0
  %240 = vmatpush1.msra.mxu0 0.0
  %241 = vmatprep.subr.mxu0 0.0
  %242 = vmatpush1.msra.mxu0 0.0
  %243 = vmatprep.subr.mxu0 0.0
  %244 = vmatpush1.msra.mxu0 0.0
  %245 = vmatprep.subr.mxu0 0.0
  %246 = vmatpush1.msra.mxu0 0.0
  %247 = vmatprep.subr.mxu0 0.0
  %248 = vmatpush1.msra.mxu0 0.0
  %249 = vmatprep.subr.mxu0 0.0
  %250 = vmatpush1.msra.mxu0 0.0
  %251 = vmatprep.subr.mxu0 0.0
  %252 = vmatpush1.msra.mxu0 0.0
  %253 = vmatprep.subr.mxu0 0.0
  %254 = vmatpush1.msra.mxu0 0.0
  %255 = vmatprep.subr.mxu0 0.0
  %256 = vmatpush1.msra.mxu0 0.0
  %257 = vmatprep.subr.mxu0 0.0
  %258 = vmatpush1.msra.mxu0 0.0
  %259 = vmatprep.subr.mxu0 0.0
  %260 = vmatpush1.msra.mxu0 0.0
  %261 = vmatprep.subr.mxu0 0.0
  %262 = vmatpush1.msra.mxu0 0.0
  %263 = vmatprep.subr.mxu0 0.0
  %264 = vmatpush1.msra.mxu0 %v118
  %265 = vmatprep.subr.mxu0 0.0
  %266 = vmatpush1.msra.mxu0 %v117
  %267 = vmatprep.subr.mxu0 0.0
  %268 = vmatpush1.msra.mxu0 %v116
  %269 = vmatprep.subr.mxu0 0.0
  %270 = vmatpush1.msra.mxu0 %v115
  %271 = vmatprep.subr.mxu0 0.0
  %272 = vmatpush2.msra.mxu0 0.0
  %273 = vmatprep.subr.mxu0 0.0
  %274 = vmatpush2.msra.mxu0 0.0
  %275 = vmatprep.subr.mxu0 0.0
  %276 = vmatpush2.msra.mxu0 0.0
  %277 = vmatprep.subr.mxu0 0.0
  %278 = vmatpush2.msra.mxu0 0.0
  %279 = vmatprep.subr.mxu0 0.0
  %280 = vmatpush2.msra.mxu0 0.0
  %281 = vmatprep.subr.mxu0 0.0
  %282 = vmatpush2.msra.mxu0 0.0
  %283 = vmatprep.subr.mxu0 0.0
  %284 = vmatpush2.msra.mxu0 0.0
  %285 = vmatprep.subr.mxu0 0.0
  %286 = vmatpush2.msra.mxu0 0.0
  %287 = vmatprep.subr.mxu0 0.0
  %288 = vmatpush2.msra.mxu0 0.0
  %289 = vmatprep.subr.mxu0 0.0
  %290 = vmatpush2.msra.mxu0 0.0
  %291 = vmatprep.subr.mxu0 0.0
  %292 = vmatpush2.msra.mxu0 0.0
  %293 = vmatprep.subr.mxu0 0.0
  %294 = vmatpush2.msra.mxu0 0.0
  %295 = vmatprep.subr.mxu0 0.0
  %296 = vmatpush2.msra.mxu0 0.0
  %297 = vmatprep.subr.mxu0 0.0
  %298 = vmatpush2.msra.mxu0 0.0
  %299 = vmatprep.subr.mxu0 0.0
  %300 = vmatpush2.msra.mxu0 0.0
  %301 = vmatprep.subr.mxu0 0.0
  %302 = vmatpush2.msra.mxu0 0.0
  %303 = vmatprep.mubr.f32.mxu0 0.0
  %304 = vmatmul.mubr.f32.gmra.mxu0 %v234
  %v305 = vpop.f32.mrf.mxu0
  %v306 = vadd.f32 0.0, %v305
  %v307 = vpop.f32.mrf.mxu0
  %308 = vmatprep.mubr.f32.mxu0 0.0
  %309 = vmatmul.mubr.f32.gmra.mxu0 %v237
  %v310 = vpop.f32.mrf.mxu0
  %v311 = vadd.f32 0.0, %v310
  %v312 = vpop.f32.mrf.mxu0
  %313 = vdwg.mxu0
  %v314 = vadd.f32 %v97, %v306
  %v315 = vadd.f32 %v102, %v311
  %v316 = vlaneseq
  %v317 = vshrl.u32 %v316, 7
  %v318 = vsub.s32 0, %v317
  %v319 = vrot.slane %v110, %v318
  %v320 = vadd.f32 %v314, %v319
  %v321 = vadd.f32 %v315, %v319
  %v322 = vld [vmem:[%s2 + $0x14e] sm:$0x1]
  %v323 = vld [vmem:[%s2 + $0x14f] sm:$0x1]
  %v324 = vld [vmem:[%s2 + $0x150] sm:$0x1]
  %v325 = vld [vmem:[%s2 + $0x151] sm:$0x1]
  %v326 = vld [vmem:[%s2 + $0x152] sm:$0x1]
  %v327 = vld [vmem:[%s2 + $0x153] sm:$0x1]
  %v328 = vld [vmem:[%s2 + $0x48] sm:$0xff]
  %v329 = vld [vmem:[%s2 + $0x50] sm:$0xff]
  %v330 = vld [vmem:[%s2 + $0x58] sm:$0xff]
  %v331 = vld [vmem:[%s2 + $0x60] sm:$0xff]
  %v332 = vld [vmem:[%s2 + $0x68] sm:$0xff]
  %v333 = vld [vmem:[%s2 + $0x70] sm:$0xff]
  %v334 = vld [vmem:[%s2 + $0x78] sm:$0xff]
  %v335 = vld [vmem:[%s2 + $0x80] sm:$0xff]
  %v336 = vlaneseq
  %v337 = vshrl.u32 %v336, 7
  %v338 = vsub.s32 0, %v337
  %v339 = vrot.slane %v322, %v338
  %v340 = vmul.f32 %v320, %v339
  %v341 = vmul.f32 %v321, %v339
  %v342 = vlaneseq
  %v343 = vshrl.u32 %v342, 7
  %v344 = vsub.s32 0, %v343
  %v345 = vrot.slane %v323, %v344
  %v346 = vadd.f32 %v340, %v345
  %v347 = vadd.f32 %v341, %v345
  %v348 = vmax.f32 %v346, 0.0
  %v349 = vmax.f32 %v347, 0.0
  %v350 = vlaneseq
  %v351 = vshrl.u32 %v350, 7
  %v352 = vsub.s32 0, %v351
  %v353 = vrot.slane %v326, %v352
  %v355 = vsel %vm137, %v348, 0
  %v358 = vsel %vm137, %v349, 0
  %360 = vmatprep.subr.mxu0 0.0
  %361 = vmatpush1.msra.mxu0 0.0
  %362 = vmatprep.subr.mxu0 0.0
  %363 = vmatpush1.msra.mxu0 0.0
  %364 = vmatprep.subr.mxu0 0.0
  %365 = vmatpush1.msra.mxu0 0.0
  %366 = vmatprep.subr.mxu0 0.0
  %367 = vmatpush1.msra.mxu0 0.0
  %368 = vmatprep.subr.mxu0 0.0
  %369 = vmatpush1.msra.mxu0 0.0
  %370 = vmatprep.subr.mxu0 0.0
  %371 = vmatpush1.msra.mxu0 0.0
  %372 = vmatprep.subr.mxu0 0.0
  %373 = vmatpush1.msra.mxu0 0.0
  %374 = vmatprep.subr.mxu0 0.0
  %375 = vmatpush1.msra.mxu0 0.0
  %376 = vmatprep.subr.mxu0 0.0
  %377 = vmatpush1.msra.mxu0 0.0
  %378 = vmatprep.subr.mxu0 0.0
  %379 = vmatpush1.msra.mxu0 0.0
  %380 = vmatprep.subr.mxu0 0.0
  %381 = vmatpush1.msra.mxu0 0.0
  %382 = vmatprep.subr.mxu0 0.0
  %383 = vmatpush1.msra.mxu0 0.0
  %384 = vmatprep.subr.mxu0 0.0
  %385 = vmatpush1.msra.mxu0 %v331
  %386 = vmatprep.subr.mxu0 0.0
  %387 = vmatpush1.msra.mxu0 %v330
  %388 = vmatprep.subr.mxu0 0.0
  %389 = vmatpush1.msra.mxu0 %v329
  %390 = vmatprep.subr.mxu0 0.0
  %391 = vmatpush1.msra.mxu0 %v328
  %392 = vmatprep.subr.mxu0 0.0
  %393 = vmatpush2.msra.mxu0 0.0
  %394 = vmatprep.subr.mxu0 0.0
  %395 = vmatpush2.msra.mxu0 0.0
  %396 = vmatprep.subr.mxu0 0.0
  %397 = vmatpush2.msra.mxu0 0.0
  %398 = vmatprep.subr.mxu0 0.0
  %399 = vmatpush2.msra.mxu0 0.0
  %400 = vmatprep.subr.mxu0 0.0
  %401 = vmatpush2.msra.mxu0 0.0
  %402 = vmatprep.subr.mxu0 0.0
  %403 = vmatpush2.msra.mxu0 0.0
  %404 = vmatprep.subr.mxu0 0.0
  %405 = vmatpush2.msra.mxu0 0.0
  %406 = vmatprep.subr.mxu0 0.0
  %407 = vmatpush2.msra.mxu0 0.0
  %408 = vmatprep.subr.mxu0 0.0
  %409 = vmatpush2.msra.mxu0 0.0
  %410 = vmatprep.subr.mxu0 0.0
  %411 = vmatpush2.msra.mxu0 0.0
  %412 = vmatprep.subr.mxu0 0.0
  %413 = vmatpush2.msra.mxu0 0.0
  %414 = vmatprep.subr.mxu0 0.0
  %415 = vmatpush2.msra.mxu0 0.0
  %416 = vmatprep.subr.mxu0 0.0
  %417 = vmatpush2.msra.mxu0 0.0
  %418 = vmatprep.subr.mxu0 0.0
  %419 = vmatpush2.msra.mxu0 0.0
  %420 = vmatprep.subr.mxu0 0.0
  %421 = vmatpush2.msra.mxu0 0.0
  %422 = vmatprep.subr.mxu0 0.0
  %423 = vmatpush2.msra.mxu0 0.0
  %424 = vmatprep.mubr.f32.mxu0 0.0
  %425 = vmatmul.mubr.f32.gmra.mxu0 %v355
  %v426 = vpop.f32.mrf.mxu0
  %v427 = vadd.f32 %v353, %v426
  %v428 = vpop.f32.mrf.mxu0
  %429 = vmatprep.mubr.f32.mxu0 0.0
  %430 = vmatmul.mubr.f32.gmra.mxu0 %v358
  %v431 = vpop.f32.mrf.mxu0
  %v432 = vadd.f32 %v353, %v431
  %v433 = vpop.f32.mrf.mxu0
  %434 = vdwg.mxu0
  %v435 = vlaneseq
  %v436 = vshrl.u32 %v435, 7
  %v437 = vsub.s32 0, %v436
  %v438 = vrot.slane %v324, %v437
  %v439 = vmul.f32 %v427, %v438
  %v440 = vmul.f32 %v432, %v438
  %v441 = vlaneseq
  %v442 = vshrl.u32 %v441, 7
  %v443 = vsub.s32 0, %v442
  %v444 = vrot.slane %v325, %v443
  %v445 = vadd.f32 %v439, %v444
  %v446 = vadd.f32 %v440, %v444
  %v447 = vmax.f32 %v445, 0.0
  %v448 = vmax.f32 %v446, 0.0
  %v450 = vsel %vm137, %v447, 0
  %v453 = vsel %vm137, %v448, 0
  %455 = vmatprep.subr.mxu0 0.0
  %456 = vmatpush1.msra.mxu0 0.0
  %457 = vmatprep.subr.mxu0 0.0
  %458 = vmatpush1.msra.mxu0 0.0
  %459 = vmatprep.subr.mxu0 0.0
  %460 = vmatpush1.msra.mxu0 0.0
  %461 = vmatprep.subr.mxu0 0.0
  %462 = vmatpush1.msra.mxu0 0.0
  %463 = vmatprep.subr.mxu0 0.0
  %464 = vmatpush1.msra.mxu0 0.0
  %465 = vmatprep.subr.mxu0 0.0
  %466 = vmatpush1.msra.mxu0 0.0
  %467 = vmatprep.subr.mxu0 0.0
  %468 = vmatpush1.msra.mxu0 0.0
  %469 = vmatprep.subr.mxu0 0.0
  %470 = vmatpush1.msra.mxu0 0.0
  %471 = vmatprep.subr.mxu0 0.0
  %472 = vmatpush1.msra.mxu0 0.0
  %473 = vmatprep.subr.mxu0 0.0
  %474 = vmatpush1.msra.mxu0 0.0
  %475 = vmatprep.subr.mxu0 0.0
  %476 = vmatpush1.msra.mxu0 0.0
  %477 = vmatprep.subr.mxu0 0.0
  %478 = vmatpush1.msra.mxu0 0.0
  %479 = vmatprep.subr.mxu0 0.0
  %480 = vmatpush1.msra.mxu0 %v335
  %481 = vmatprep.subr.mxu0 0.0
  %482 = vmatpush1.msra.mxu0 %v334
  %483 = vmatprep.subr.mxu0 0.0
  %484 = vmatpush1.msra.mxu0 %v333
  %485 = vmatprep.subr.mxu0 0.0
  %486 = vmatpush1.msra.mxu0 %v332
  %487 = vmatprep.subr.mxu0 0.0
  %488 = vmatpush2.msra.mxu0 0.0
  %489 = vmatprep.subr.mxu0 0.0
  %490 = vmatpush2.msra.mxu0 0.0
  %491 = vmatprep.subr.mxu0 0.0
  %492 = vmatpush2.msra.mxu0 0.0
  %493 = vmatprep.subr.mxu0 0.0
  %494 = vmatpush2.msra.mxu0 0.0
  %495 = vmatprep.subr.mxu0 0.0
  %496 = vmatpush2.msra.mxu0 0.0
  %497 = vmatprep.subr.mxu0 0.0
  %498 = vmatpush2.msra.mxu0 0.0
  %499 = vmatprep.subr.mxu0 0.0
  %500 = vmatpush2.msra.mxu0 0.0
  %501 = vmatprep.subr.mxu0 0.0
  %502 = vmatpush2.msra.mxu0 0.0
  %503 = vmatprep.subr.mxu0 0.0
  %504 = vmatpush2.msra.mxu0 0.0
  %505 = vmatprep.subr.mxu0 0.0
  %506 = vmatpush2.msra.mxu0 0.0
  %507 = vmatprep.subr.mxu0 0.0
  %508 = vmatpush2.msra.mxu0 0.0
  %509 = vmatprep.subr.mxu0 0.0
  %510 = vmatpush2.msra.mxu0 0.0
  %511 = vmatprep.subr.mxu0 0.0
  %512 = vmatpush2.msra.mxu0 0.0
  %513 = vmatprep.subr.mxu0 0.0
  %514 = vmatpush2.msra.mxu0 0.0
  %515 = vmatprep.subr.mxu0 0.0
  %516 = vmatpush2.msra.mxu0 0.0
  %517 = vmatprep.subr.mxu0 0.0
  %518 = vmatpush2.msra.mxu0 0.0
  %519 = vmatprep.mubr.f32.mxu0 0.0
  %520 = vmatmul.mubr.f32.gmra.mxu0 %v450
  %v521 = vpop.f32.mrf.mxu0
  %v522 = vadd.f32 0.0, %v521
  %v523 = vpop.f32.mrf.mxu0
  %524 = vmatprep.mubr.f32.mxu0 0.0
  %525 = vmatmul.mubr.f32.gmra.mxu0 %v453
  %v526 = vpop.f32.mrf.mxu0
  %v527 = vadd.f32 0.0, %v526
  %v528 = vpop.f32.mrf.mxu0
  %529 = vdwg.mxu0
  %v530 = vadd.f32 %v320, %v522
  %v531 = vadd.f32 %v321, %v527
  %v532 = vlaneseq
  %v533 = vshrl.u32 %v532, 7
  %v534 = vsub.s32 0, %v533
  %v535 = vrot.slane %v327, %v534
  %v536 = vadd.f32 %v530, %v535
  %v537 = vadd.f32 %v531, %v535
  %v538 = vld [vmem:[%s2 + $0x154] sm:$0x1]
  %v539 = vld [vmem:[%s2 + $0x155] sm:$0x1]
  %v540 = vld [vmem:[%s2 + $0x156] sm:$0x1]
  %v541 = vld [vmem:[%s2 + $0x157] sm:$0x1]
  %v542 = vld [vmem:[%s2 + $0x158] sm:$0x1]
  %v543 = vld [vmem:[%s2 + $0x159] sm:$0x1]
  %v544 = vld [vmem:[%s2 + $0x88] sm:$0xff]
  %v545 = vld [vmem:[%s2 + $0x90] sm:$0xff]
  %v546 = vld [vmem:[%s2 + $0x98] sm:$0xff]
  %v547 = vld [vmem:[%s2 + $0xa0] sm:$0xff]
  %v548 = vld [vmem:[%s2 + $0xa8] sm:$0xff]
  %v549 = vld [vmem:[%s2 + $0xb0] sm:$0xff]
  %v550 = vld [vmem:[%s2 + $0xb8] sm:$0xff]
  %v551 = vld [vmem:[%s2 + $0xc0] sm:$0xff]
  %v552 = vlaneseq
  %v553 = vshrl.u32 %v552, 7
  %v554 = vsub.s32 0, %v553
  %v555 = vrot.slane %v538, %v554
  %v556 = vmul.f32 %v536, %v555
  %v557 = vmul.f32 %v537, %v555
  %v558 = vlaneseq
  %v559 = vshrl.u32 %v558, 7
  %v560 = vsub.s32 0, %v559
  %v561 = vrot.slane %v539, %v560
  %v562 = vadd.f32 %v556, %v561
  %v563 = vadd.f32 %v557, %v561
  %v564 = vmax.f32 %v562, 0.0
  %v565 = vmax.f32 %v563, 0.0
  %v566 = vlaneseq
  %v567 = vshrl.u32 %v566, 7
  %v568 = vsub.s32 0, %v567
  %v569 = vrot.slane %v542, %v568
  %v571 = vsel %vm137, %v564, 0
  %v574 = vsel %vm137, %v565, 0
  %576 = vmatprep.subr.mxu0 0.0
  %577 = vmatpush1.msra.mxu0 0.0
  %578 = vmatprep.subr.mxu0 0.0
  %579 = vmatpush1.msra.mxu0 0.0
  %580 = vmatprep.subr.mxu0 0.0
  %581 = vmatpush1.msra.mxu0 0.0
  %582 = vmatprep.subr.mxu0 0.0
  %583 = vmatpush1.msra.mxu0 0.0
  %584 = vmatprep.subr.mxu0 0.0
  %585 = vmatpush1.msra.mxu0 0.0
  %586 = vmatprep.subr.mxu0 0.0
  %587 = vmatpush1.msra.mxu0 0.0
  %588 = vmatprep.subr.mxu0 0.0
  %589 = vmatpush1.msra.mxu0 0.0
  %590 = vmatprep.subr.mxu0 0.0
  %591 = vmatpush1.msra.mxu0 0.0
  %592 = vmatprep.subr.mxu0 0.0
  %593 = vmatpush1.msra.mxu0 0.0
  %594 = vmatprep.subr.mxu0 0.0
  %595 = vmatpush1.msra.mxu0 0.0
  %596 = vmatprep.subr.mxu0 0.0
  %597 = vmatpush1.msra.mxu0 0.0
  %598 = vmatprep.subr.mxu0 0.0
  %599 = vmatpush1.msra.mxu0 0.0
  %600 = vmatprep.subr.mxu0 0.0
  %601 = vmatpush1.msra.mxu0 %v547
  %602 = vmatprep.subr.mxu0 0.0
  %603 = vmatpush1.msra.mxu0 %v546
  %604 = vmatprep.subr.mxu0 0.0
  %605 = vmatpush1.msra.mxu0 %v545
  %606 = vmatprep.subr.mxu0 0.0
  %607 = vmatpush1.msra.mxu0 %v544
  %608 = vmatprep.subr.mxu0 0.0
  %609 = vmatpush2.msra.mxu0 0.0
  %610 = vmatprep.subr.mxu0 0.0
  %611 = vmatpush2.msra.mxu0 0.0
  %612 = vmatprep.subr.mxu0 0.0
  %613 = vmatpush2.msra.mxu0 0.0
  %614 = vmatprep.subr.mxu0 0.0
  %615 = vmatpush2.msra.mxu0 0.0
  %616 = vmatprep.subr.mxu0 0.0
  %617 = vmatpush2.msra.mxu0 0.0
  %618 = vmatprep.subr.mxu0 0.0
  %619 = vmatpush2.msra.mxu0 0.0
  %620 = vmatprep.subr.mxu0 0.0
  %621 = vmatpush2.msra.mxu0 0.0
  %622 = vmatprep.subr.mxu0 0.0
  %623 = vmatpush2.msra.mxu0 0.0
  %624 = vmatprep.subr.mxu0 0.0
  %625 = vmatpush2.msra.mxu0 0.0
  %626 = vmatprep.subr.mxu0 0.0
  %627 = vmatpush2.msra.mxu0 0.0
  %628 = vmatprep.subr.mxu0 0.0
  %629 = vmatpush2.msra.mxu0 0.0
  %630 = vmatprep.subr.mxu0 0.0
  %631 = vmatpush2.msra.mxu0 0.0
  %632 = vmatprep.subr.mxu0 0.0
  %633 = vmatpush2.msra.mxu0 0.0
  %634 = vmatprep.subr.mxu0 0.0
  %635 = vmatpush2.msra.mxu0 0.0
  %636 = vmatprep.subr.mxu0 0.0
  %637 = vmatpush2.msra.mxu0 0.0
  %638 = vmatprep.subr.mxu0 0.0
  %639 = vmatpush2.msra.mxu0 0.0
  %640 = vmatprep.mubr.f32.mxu0 0.0
  %641 = vmatmul.mubr.f32.gmra.mxu0 %v571
  %v642 = vpop.f32.mrf.mxu0
  %v643 = vadd.f32 %v569, %v642
  %v644 = vpop.f32.mrf.mxu0
  %645 = vmatprep.mubr.f32.mxu0 0.0
  %646 = vmatmul.mubr.f32.gmra.mxu0 %v574
  %v647 = vpop.f32.mrf.mxu0
  %v648 = vadd.f32 %v569, %v647
  %v649 = vpop.f32.mrf.mxu0
  %650 = vdwg.mxu0
  %v651 = vlaneseq
  %v652 = vshrl.u32 %v651, 7
  %v653 = vsub.s32 0, %v652
  %v654 = vrot.slane %v540, %v653
  %v655 = vmul.f32 %v643, %v654
  %v656 = vmul.f32 %v648, %v654
  %v657 = vlaneseq
  %v658 = vshrl.u32 %v657, 7
  %v659 = vsub.s32 0, %v658
  %v660 = vrot.slane %v541, %v659
  %v661 = vadd.f32 %v655, %v660
  %v662 = vadd.f32 %v656, %v660
  %v663 = vmax.f32 %v661, 0.0
  %v664 = vmax.f32 %v662, 0.0
  %v666 = vsel %vm137, %v663, 0
  %v669 = vsel %vm137, %v664, 0
  %671 = vmatprep.subr.mxu0 0.0
  %672 = vmatpush1.msra.mxu0 0.0
  %673 = vmatprep.subr.mxu0 0.0
  %674 = vmatpush1.msra.mxu0 0.0
  %675 = vmatprep.subr.mxu0 0.0
  %676 = vmatpush1.msra.mxu0 0.0
  %677 = vmatprep.subr.mxu0 0.0
  %678 = vmatpush1.msra.mxu0 0.0
  %679 = vmatprep.subr.mxu0 0.0
  %680 = vmatpush1.msra.mxu0 0.0
  %681 = vmatprep.subr.mxu0 0.0
  %682 = vmatpush1.msra.mxu0 0.0
  %683 = vmatprep.subr.mxu0 0.0
  %684 = vmatpush1.msra.mxu0 0.0
  %685 = vmatprep.subr.mxu0 0.0
  %686 = vmatpush1.msra.mxu0 0.0
  %687 = vmatprep.subr.mxu0 0.0
  %688 = vmatpush1.msra.mxu0 0.0
  %689 = vmatprep.subr.mxu0 0.0
  %690 = vmatpush1.msra.mxu0 0.0
  %691 = vmatprep.subr.mxu0 0.0
  %692 = vmatpush1.msra.mxu0 0.0
  %693 = vmatprep.subr.mxu0 0.0
  %694 = vmatpush1.msra.mxu0 0.0
  %695 = vmatprep.subr.mxu0 0.0
  %696 = vmatpush1.msra.mxu0 %v551
  %697 = vmatprep.subr.mxu0 0.0
  %698 = vmatpush1.msra.mxu0 %v550
  %699 = vmatprep.subr.mxu0 0.0
  %700 = vmatpush1.msra.mxu0 %v549
  %701 = vmatprep.subr.mxu0 0.0
  %702 = vmatpush1.msra.mxu0 %v548
  %703 = vmatprep.subr.mxu0 0.0
  %704 = vmatpush2.msra.mxu0 0.0
  %705 = vmatprep.subr.mxu0 0.0
  %706 = vmatpush2.msra.mxu0 0.0
  %707 = vmatprep.subr.mxu0 0.0
  %708 = vmatpush2.msra.mxu0 0.0
  %709 = vmatprep.subr.mxu0 0.0
  %710 = vmatpush2.msra.mxu0 0.0
  %711 = vmatprep.subr.mxu0 0.0
  %712 = vmatpush2.msra.mxu0 0.0
  %713 = vmatprep.subr.mxu0 0.0
  %714 = vmatpush2.msra.mxu0 0.0
  %715 = vmatprep.subr.mxu0 0.0
  %716 = vmatpush2.msra.mxu0 0.0
  %717 = vmatprep.subr.mxu0 0.0
  %718 = vmatpush2.msra.mxu0 0.0
  %719 = vmatprep.subr.mxu0 0.0
  %720 = vmatpush2.msra.mxu0 0.0
  %721 = vmatprep.subr.mxu0 0.0
  %722 = vmatpush2.msra.mxu0 0.0
  %723 = vmatprep.subr.mxu0 0.0
  %724 = vmatpush2.msra.mxu0 0.0
  %725 = vmatprep.subr.mxu0 0.0
  %726 = vmatpush2.msra.mxu0 0.0
  %727 = vmatprep.subr.mxu0 0.0
  %728 = vmatpush2.msra.mxu0 0.0
  %729 = vmatprep.subr.mxu0 0.0
  %730 = vmatpush2.msra.mxu0 0.0
  %731 = vmatprep.subr.mxu0 0.0
  %732 = vmatpush2.msra.mxu0 0.0
  %733 = vmatprep.subr.mxu0 0.0
  %734 = vmatpush2.msra.mxu0 0.0
  %735 = vmatprep.mubr.f32.mxu0 0.0
  %736 = vmatmul.mubr.f32.gmra.mxu0 %v666
  %v737 = vpop.f32.mrf.mxu0
  %v738 = vadd.f32 0.0, %v737
  %v739 = vpop.f32.mrf.mxu0
  %740 = vmatprep.mubr.f32.mxu0 0.0
  %741 = vmatmul.mubr.f32.gmra.mxu0 %v669
  %v742 = vpop.f32.mrf.mxu0
  %v743 = vadd.f32 0.0, %v742
  %v744 = vpop.f32.mrf.mxu0
  %745 = vdwg.mxu0
  %v746 = vadd.f32 %v536, %v738
  %v747 = vadd.f32 %v537, %v743
  %v748 = vlaneseq
  %v749 = vshrl.u32 %v748, 7
  %v750 = vsub.s32 0, %v749
  %v751 = vrot.slane %v543, %v750
  %v752 = vadd.f32 %v746, %v751
  %v753 = vadd.f32 %v747, %v751
  %v754 = vld [vmem:[%s2 + $0x15a] sm:$0x1]
  %v755 = vld [vmem:[%s2 + $0x15b] sm:$0x1]
  %v756 = vld [vmem:[%s2 + $0x15c] sm:$0x1]
  %v757 = vld [vmem:[%s2 + $0x15d] sm:$0x1]
  %v758 = vld [vmem:[%s2 + $0x15e] sm:$0x1]
  %v759 = vld [vmem:[%s2 + $0x15f] sm:$0x1]
  %v760 = vld [vmem:[%s2 + $0xc8] sm:$0xff]
  %v761 = vld [vmem:[%s2 + $0xd0] sm:$0xff]
  %v762 = vld [vmem:[%s2 + $0xd8] sm:$0xff]
  %v763 = vld [vmem:[%s2 + $0xe0] sm:$0xff]
  %v764 = vld [vmem:[%s2 + $0xe8] sm:$0xff]
  %v765 = vld [vmem:[%s2 + $0xf0] sm:$0xff]
  %v766 = vld [vmem:[%s2 + $0xf8] sm:$0xff]
  %v767 = vld [vmem:[%s2 + $0x100] sm:$0xff]
  %v768 = vlaneseq
  %v769 = vshrl.u32 %v768, 7
  %v770 = vsub.s32 0, %v769
  %v771 = vrot.slane %v754, %v770
  %v772 = vmul.f32 %v752, %v771
  %v773 = vmul.f32 %v753, %v771
  %v774 = vlaneseq
  %v775 = vshrl.u32 %v774, 7
  %v776 = vsub.s32 0, %v775
  %v777 = vrot.slane %v755, %v776
  %v778 = vadd.f32 %v772, %v777
  %v779 = vadd.f32 %v773, %v777
  %v780 = vmax.f32 %v778, 0.0
  %v781 = vmax.f32 %v779, 0.0
  %v782 = vlaneseq
  %v783 = vshrl.u32 %v782, 7
  %v784 = vsub.s32 0, %v783
  %v785 = vrot.slane %v758, %v784
  %v787 = vsel %vm137, %v780, 0
  %v790 = vsel %vm137, %v781, 0
  %792 = vmatprep.subr.mxu0 0.0
  %793 = vmatpush1.msra.mxu0 0.0
  %794 = vmatprep.subr.mxu0 0.0
  %795 = vmatpush1.msra.mxu0 0.0
  %796 = vmatprep.subr.mxu0 0.0
  %797 = vmatpush1.msra.mxu0 0.0
  %798 = vmatprep.subr.mxu0 0.0
  %799 = vmatpush1.msra.mxu0 0.0
  %800 = vmatprep.subr.mxu0 0.0
  %801 = vmatpush1.msra.mxu0 0.0
  %802 = vmatprep.subr.mxu0 0.0
  %803 = vmatpush1.msra.mxu0 0.0
  %804 = vmatprep.subr.mxu0 0.0
  %805 = vmatpush1.msra.mxu0 0.0
  %806 = vmatprep.subr.mxu0 0.0
  %807 = vmatpush1.msra.mxu0 0.0
  %808 = vmatprep.subr.mxu0 0.0
  %809 = vmatpush1.msra.mxu0 0.0
  %810 = vmatprep.subr.mxu0 0.0
  %811 = vmatpush1.msra.mxu0 0.0
  %812 = vmatprep.subr.mxu0 0.0
  %813 = vmatpush1.msra.mxu0 0.0
  %814 = vmatprep.subr.mxu0 0.0
  %815 = vmatpush1.msra.mxu0 0.0
  %816 = vmatprep.subr.mxu0 0.0
  %817 = vmatpush1.msra.mxu0 %v763
  %818 = vmatprep.subr.mxu0 0.0
  %819 = vmatpush1.msra.mxu0 %v762
  %820 = vmatprep.subr.mxu0 0.0
  %821 = vmatpush1.msra.mxu0 %v761
  %822 = vmatprep.subr.mxu0 0.0
  %823 = vmatpush1.msra.mxu0 %v760
  %824 = vmatprep.subr.mxu0 0.0
  %825 = vmatpush2.msra.mxu0 0.0
  %826 = vmatprep.subr.mxu0 0.0
  %827 = vmatpush2.msra.mxu0 0.0
  %828 = vmatprep.subr.mxu0 0.0
  %829 = vmatpush2.msra.mxu0 0.0
  %830 = vmatprep.subr.mxu0 0.0
  %831 = vmatpush2.msra.mxu0 0.0
  %832 = vmatprep.subr.mxu0 0.0
  %833 = vmatpush2.msra.mxu0 0.0
  %834 = vmatprep.subr.mxu0 0.0
  %835 = vmatpush2.msra.mxu0 0.0
  %836 = vmatprep.subr.mxu0 0.0
  %837 = vmatpush2.msra.mxu0 0.0
  %838 = vmatprep.subr.mxu0 0.0
  %839 = vmatpush2.msra.mxu0 0.0
  %840 = vmatprep.subr.mxu0 0.0
  %841 = vmatpush2.msra.mxu0 0.0
  %842 = vmatprep.subr.mxu0 0.0
  %843 = vmatpush2.msra.mxu0 0.0
  %844 = vmatprep.subr.mxu0 0.0
  %845 = vmatpush2.msra.mxu0 0.0
  %846 = vmatprep.subr.mxu0 0.0
  %847 = vmatpush2.msra.mxu0 0.0
  %848 = vmatprep.subr.mxu0 0.0
  %849 = vmatpush2.msra.mxu0 0.0
  %850 = vmatprep.subr.mxu0 0.0
  %851 = vmatpush2.msra.mxu0 0.0
  %852 = vmatprep.subr.mxu0 0.0
  %853 = vmatpush2.msra.mxu0 0.0
  %854 = vmatprep.subr.mxu0 0.0
  %855 = vmatpush2.msra.mxu0 0.0
  %856 = vmatprep.mubr.f32.mxu0 0.0
  %857 = vmatmul.mubr.f32.gmra.mxu0 %v787
  %v858 = vpop.f32.mrf.mxu0
  %v859 = vadd.f32 %v785, %v858
  %v860 = vpop.f32.mrf.mxu0
  %861 = vmatprep.mubr.f32.mxu0 0.0
  %862 = vmatmul.mubr.f32.gmra.mxu0 %v790
  %v863 = vpop.f32.mrf.mxu0
  %v864 = vadd.f32 %v785, %v863
  %v865 = vpop.f32.mrf.mxu0
  %866 = vdwg.mxu0
  %v867 = vlaneseq
  %v868 = vshrl.u32 %v867, 7
  %v869 = vsub.s32 0, %v868
  %v870 = vrot.slane %v756, %v869
  %v871 = vmul.f32 %v859, %v870
  %v872 = vmul.f32 %v864, %v870
  %v873 = vlaneseq
  %v874 = vshrl.u32 %v873, 7
  %v875 = vsub.s32 0, %v874
  %v876 = vrot.slane %v757, %v875
  %v877 = vadd.f32 %v871, %v876
  %v878 = vadd.f32 %v872, %v876
  %v879 = vmax.f32 %v877, 0.0
  %v880 = vmax.f32 %v878, 0.0
  %v882 = vsel %vm137, %v879, 0
  %v885 = vsel %vm137, %v880, 0
  %887 = vmatprep.subr.mxu0 0.0
  %888 = vmatpush1.msra.mxu0 0.0
  %889 = vmatprep.subr.mxu0 0.0
  %890 = vmatpush1.msra.mxu0 0.0
  %891 = vmatprep.subr.mxu0 0.0
  %892 = vmatpush1.msra.mxu0 0.0
  %893 = vmatprep.subr.mxu0 0.0
  %894 = vmatpush1.msra.mxu0 0.0
  %895 = vmatprep.subr.mxu0 0.0
  %896 = vmatpush1.msra.mxu0 0.0
  %897 = vmatprep.subr.mxu0 0.0
  %898 = vmatpush1.msra.mxu0 0.0
  %899 = vmatprep.subr.mxu0 0.0
  %900 = vmatpush1.msra.mxu0 0.0
  %901 = vmatprep.subr.mxu0 0.0
  %902 = vmatpush1.msra.mxu0 0.0
  %903 = vmatprep.subr.mxu0 0.0
  %904 = vmatpush1.msra.mxu0 0.0
  %905 = vmatprep.subr.mxu0 0.0
  %906 = vmatpush1.msra.mxu0 0.0
  %907 = vmatprep.subr.mxu0 0.0
  %908 = vmatpush1.msra.mxu0 0.0
  %909 = vmatprep.subr.mxu0 0.0
  %910 = vmatpush1.msra.mxu0 0.0
  %911 = vmatprep.subr.mxu0 0.0
  %912 = vmatpush1.msra.mxu0 %v767
  %913 = vmatprep.subr.mxu0 0.0
  %914 = vmatpush1.msra.mxu0 %v766
  %915 = vmatprep.subr.mxu0 0.0
  %916 = vmatpush1.msra.mxu0 %v765
  %917 = vmatprep.subr.mxu0 0.0
  %918 = vmatpush1.msra.mxu0 %v764
  %919 = vmatprep.subr.mxu0 0.0
  %920 = vmatpush2.msra.mxu0 0.0
  %921 = vmatprep.subr.mxu0 0.0
  %922 = vmatpush2.msra.mxu0 0.0
  %923 = vmatprep.subr.mxu0 0.0
  %924 = vmatpush2.msra.mxu0 0.0
  %925 = vmatprep.subr.mxu0 0.0
  %926 = vmatpush2.msra.mxu0 0.0
  %927 = vmatprep.subr.mxu0 0.0
  %928 = vmatpush2.msra.mxu0 0.0
  %929 = vmatprep.subr.mxu0 0.0
  %930 = vmatpush2.msra.mxu0 0.0
  %931 = vmatprep.subr.mxu0 0.0
  %932 = vmatpush2.msra.mxu0 0.0
  %933 = vmatprep.subr.mxu0 0.0
  %934 = vmatpush2.msra.mxu0 0.0
  %935 = vmatprep.subr.mxu0 0.0
  %936 = vmatpush2.msra.mxu0 0.0
  %937 = vmatprep.subr.mxu0 0.0
  %938 = vmatpush2.msra.mxu0 0.0
  %939 = vmatprep.subr.mxu0 0.0
  %940 = vmatpush2.msra.mxu0 0.0
  %941 = vmatprep.subr.mxu0 0.0
  %942 = vmatpush2.msra.mxu0 0.0
  %943 = vmatprep.subr.mxu0 0.0
  %944 = vmatpush2.msra.mxu0 0.0
  %945 = vmatprep.subr.mxu0 0.0
  %946 = vmatpush2.msra.mxu0 0.0
  %947 = vmatprep.subr.mxu0 0.0
  %948 = vmatpush2.msra.mxu0 0.0
  %949 = vmatprep.subr.mxu0 0.0
  %950 = vmatpush2.msra.mxu0 0.0
  %951 = vmatprep.mubr.f32.mxu0 0.0
  %952 = vmatmul.mubr.f32.gmra.mxu0 %v882
  %v953 = vpop.f32.mrf.mxu0
  %v954 = vadd.f32 0.0, %v953
  %v955 = vpop.f32.mrf.mxu0
  %956 = vmatprep.mubr.f32.mxu0 0.0
  %957 = vmatmul.mubr.f32.gmra.mxu0 %v885
  %v958 = vpop.f32.mrf.mxu0
  %v959 = vadd.f32 0.0, %v958
  %v960 = vpop.f32.mrf.mxu0
  %961 = vdwg.mxu0
  %v962 = vadd.f32 %v752, %v954
  %v963 = vadd.f32 %v753, %v959
  %v964 = vlaneseq
  %v965 = vshrl.u32 %v964, 7
  %v966 = vsub.s32 0, %v965
  %v967 = vrot.slane %v759, %v966
  %v968 = vadd.f32 %v962, %v967
  %v969 = vadd.f32 %v963, %v967
  %v970 = vld [vmem:[%s2 + $0x160] sm:$0x1]
  %v971 = vld [vmem:[%s2 + $0x161] sm:$0x1]
  %v972 = vld [vmem:[%s2 + $0x162] sm:$0x1]
  %v973 = vld [vmem:[%s2 + $0x163] sm:$0x1]
  %v974 = vld [vmem:[%s2 + $0x164] sm:$0x1]
  %v975 = vld [vmem:[%s2 + $0x165] sm:$0x1]
  %v976 = vld [vmem:[%s2 + $0x108] sm:$0xff]
  %v977 = vld [vmem:[%s2 + $0x110] sm:$0xff]
  %v978 = vld [vmem:[%s2 + $0x118] sm:$0xff]
  %v979 = vld [vmem:[%s2 + $0x120] sm:$0xff]
  %v980 = vld [vmem:[%s2 + $0x128] sm:$0xff]
  %v981 = vld [vmem:[%s2 + $0x130] sm:$0xff]
  %v982 = vld [vmem:[%s2 + $0x138] sm:$0xff]
  %v983 = vld [vmem:[%s2 + $0x140] sm:$0xff]
  %v984 = vlaneseq
  %v985 = vshrl.u32 %v984, 7
  %v986 = vsub.s32 0, %v985
  %v987 = vrot.slane %v970, %v986
  %v988 = vmul.f32 %v968, %v987
  %v989 = vmul.f32 %v969, %v987
  %v990 = vlaneseq
  %v991 = vshrl.u32 %v990, 7
  %v992 = vsub.s32 0, %v991
  %v993 = vrot.slane %v971, %v992
  %v994 = vadd.f32 %v988, %v993
  %v995 = vadd.f32 %v989, %v993
  %v996 = vmax.f32 %v994, 0.0
  %v997 = vmax.f32 %v995, 0.0
  %v998 = vlaneseq
  %v999 = vshrl.u32 %v998, 7
  %v1000 = vsub.s32 0, %v999
  %v1001 = vrot.slane %v974, %v1000
  %v1003 = vsel %vm137, %v996, 0
  %v1006 = vsel %vm137, %v997, 0
  %1008 = vmatprep.subr.mxu0 0.0
  %1009 = vmatpush1.msra.mxu0 0.0
  %1010 = vmatprep.subr.mxu0 0.0
  %1011 = vmatpush1.msra.mxu0 0.0
  %1012 = vmatprep.subr.mxu0 0.0
  %1013 = vmatpush1.msra.mxu0 0.0
  %1014 = vmatprep.subr.mxu0 0.0
  %1015 = vmatpush1.msra.mxu0 0.0
  %1016 = vmatprep.subr.mxu0 0.0
  %1017 = vmatpush1.msra.mxu0 0.0
  %1018 = vmatprep.subr.mxu0 0.0
  %1019 = vmatpush1.msra.mxu0 0.0
  %1020 = vmatprep.subr.mxu0 0.0
  %1021 = vmatpush1.msra.mxu0 0.0
  %1022 = vmatprep.subr.mxu0 0.0
  %1023 = vmatpush1.msra.mxu0 0.0
  %1024 = vmatprep.subr.mxu0 0.0
  %1025 = vmatpush1.msra.mxu0 0.0
  %1026 = vmatprep.subr.mxu0 0.0
  %1027 = vmatpush1.msra.mxu0 0.0
  %1028 = vmatprep.subr.mxu0 0.0
  %1029 = vmatpush1.msra.mxu0 0.0
  %1030 = vmatprep.subr.mxu0 0.0
  %1031 = vmatpush1.msra.mxu0 0.0
  %1032 = vmatprep.subr.mxu0 0.0
  %1033 = vmatpush1.msra.mxu0 %v979
  %1034 = vmatprep.subr.mxu0 0.0
  %1035 = vmatpush1.msra.mxu0 %v978
  %1036 = vmatprep.subr.mxu0 0.0
  %1037 = vmatpush1.msra.mxu0 %v977
  %1038 = vmatprep.subr.mxu0 0.0
  %1039 = vmatpush1.msra.mxu0 %v976
  %1040 = vmatprep.subr.mxu0 0.0
  %1041 = vmatpush2.msra.mxu0 0.0
  %1042 = vmatprep.subr.mxu0 0.0
  %1043 = vmatpush2.msra.mxu0 0.0
  %1044 = vmatprep.subr.mxu0 0.0
  %1045 = vmatpush2.msra.mxu0 0.0
  %1046 = vmatprep.subr.mxu0 0.0
  %1047 = vmatpush2.msra.mxu0 0.0
  %1048 = vmatprep.subr.mxu0 0.0
  %1049 = vmatpush2.msra.mxu0 0.0
  %1050 = vmatprep.subr.mxu0 0.0
  %1051 = vmatpush2.msra.mxu0 0.0
  %1052 = vmatprep.subr.mxu0 0.0
  %1053 = vmatpush2.msra.mxu0 0.0
  %1054 = vmatprep.subr.mxu0 0.0
  %1055 = vmatpush2.msra.mxu0 0.0
  %1056 = vmatprep.subr.mxu0 0.0
  %1057 = vmatpush2.msra.mxu0 0.0
  %1058 = vmatprep.subr.mxu0 0.0
  %1059 = vmatpush2.msra.mxu0 0.0
  %1060 = vmatprep.subr.mxu0 0.0
  %1061 = vmatpush2.msra.mxu0 0.0
  %1062 = vmatprep.subr.mxu0 0.0
  %1063 = vmatpush2.msra.mxu0 0.0
  %1064 = vmatprep.subr.mxu0 0.0
  %1065 = vmatpush2.msra.mxu0 0.0
  %1066 = vmatprep.subr.mxu0 0.0
  %1067 = vmatpush2.msra.mxu0 0.0
  %1068 = vmatprep.subr.mxu0 0.0
  %1069 = vmatpush2.msra.mxu0 0.0
  %1070 = vmatprep.subr.mxu0 0.0
  %1071 = vmatpush2.msra.mxu0 0.0
  %1072 = vmatprep.mubr.f32.mxu0 0.0
  %1073 = vmatmul.mubr.f32.gmra.mxu0 %v1003
  %v1074 = vpop.f32.mrf.mxu0
  %v1075 = vadd.f32 %v1001, %v1074
  %v1076 = vpop.f32.mrf.mxu0
  %1077 = vmatprep.mubr.f32.mxu0 0.0
  %1078 = vmatmul.mubr.f32.gmra.mxu0 %v1006
  %v1079 = vpop.f32.mrf.mxu0
  %v1080 = vadd.f32 %v1001, %v1079
  %v1081 = vpop.f32.mrf.mxu0
  %1082 = vdwg.mxu0
  %v1083 = vlaneseq
  %v1084 = vshrl.u32 %v1083, 7
  %v1085 = vsub.s32 0, %v1084
  %v1086 = vrot.slane %v972, %v1085
  %v1087 = vmul.f32 %v1075, %v1086
  %v1088 = vmul.f32 %v1080, %v1086
  %v1089 = vlaneseq
  %v1090 = vshrl.u32 %v1089, 7
  %v1091 = vsub.s32 0, %v1090
  %v1092 = vrot.slane %v973, %v1091
  %v1093 = vadd.f32 %v1087, %v1092
  %v1094 = vadd.f32 %v1088, %v1092
  %v1095 = vmax.f32 %v1093, 0.0
  %v1096 = vmax.f32 %v1094, 0.0
  %v1098 = vsel %vm137, %v1095, 0
  %v1101 = vsel %vm137, %v1096, 0
  %1103 = vmatprep.subr.mxu0 0.0
  %1104 = vmatpush1.msra.mxu0 0.0
  %1105 = vmatprep.subr.mxu0 0.0
  %1106 = vmatpush1.msra.mxu0 0.0
  %1107 = vmatprep.subr.mxu0 0.0
  %1108 = vmatpush1.msra.mxu0 0.0
  %1109 = vmatprep.subr.mxu0 0.0
  %1110 = vmatpush1.msra.mxu0 0.0
  %1111 = vmatprep.subr.mxu0 0.0
  %1112 = vmatpush1.msra.mxu0 0.0
  %1113 = vmatprep.subr.mxu0 0.0
  %1114 = vmatpush1.msra.mxu0 0.0
  %1115 = vmatprep.subr.mxu0 0.0
  %1116 = vmatpush1.msra.mxu0 0.0
  %1117 = vmatprep.subr.mxu0 0.0
  %1118 = vmatpush1.msra.mxu0 0.0
  %1119 = vmatprep.subr.mxu0 0.0
  %1120 = vmatpush1.msra.mxu0 0.0
  %1121 = vmatprep.subr.mxu0 0.0
  %1122 = vmatpush1.msra.mxu0 0.0
  %1123 = vmatprep.subr.mxu0 0.0
  %1124 = vmatpush1.msra.mxu0 0.0
  %1125 = vmatprep.subr.mxu0 0.0
  %1126 = vmatpush1.msra.mxu0 0.0
  %1127 = vmatprep.subr.mxu0 0.0
  %1128 = vmatpush1.msra.mxu0 %v983
  %1129 = vmatprep.subr.mxu0 0.0
  %1130 = vmatpush1.msra.mxu0 %v982
  %1131 = vmatprep.subr.mxu0 0.0
  %1132 = vmatpush1.msra.mxu0 %v981
  %1133 = vmatprep.subr.mxu0 0.0
  %1134 = vmatpush1.msra.mxu0 %v980
  %1135 = vmatprep.subr.mxu0 0.0
  %1136 = vmatpush2.msra.mxu0 0.0
  %1137 = vmatprep.subr.mxu0 0.0
  %1138 = vmatpush2.msra.mxu0 0.0
  %1139 = vmatprep.subr.mxu0 0.0
  %1140 = vmatpush2.msra.mxu0 0.0
  %1141 = vmatprep.subr.mxu0 0.0
  %1142 = vmatpush2.msra.mxu0 0.0
  %1143 = vmatprep.subr.mxu0 0.0
  %1144 = vmatpush2.msra.mxu0 0.0
  %1145 = vmatprep.subr.mxu0 0.0
  %1146 = vmatpush2.msra.mxu0 0.0
  %1147 = vmatprep.subr.mxu0 0.0
  %1148 = vmatpush2.msra.mxu0 0.0
  %1149 = vmatprep.subr.mxu0 0.0
  %1150 = vmatpush2.msra.mxu0 0.0
  %1151 = vmatprep.subr.mxu0 0.0
  %1152 = vmatpush2.msra.mxu0 0.0
  %1153 = vmatprep.subr.mxu0 0.0
  %1154 = vmatpush2.msra.mxu0 0.0
  %1155 = vmatprep.subr.mxu0 0.0
  %1156 = vmatpush2.msra.mxu0 0.0
  %1157 = vmatprep.subr.mxu0 0.0
  %1158 = vmatpush2.msra.mxu0 0.0
  %1159 = vmatprep.subr.mxu0 0.0
  %1160 = vmatpush2.msra.mxu0 0.0
  %1161 = vmatprep.subr.mxu0 0.0
  %1162 = vmatpush2.msra.mxu0 0.0
  %1163 = vmatprep.subr.mxu0 0.0
  %1164 = vmatpush2.msra.mxu0 0.0
  %1165 = vmatprep.subr.mxu0 0.0
  %1166 = vmatpush2.msra.mxu0 0.0
  %1167 = vmatprep.mubr.f32.mxu0 0.0
  %1168 = vmatmul.mubr.f32.gmra.mxu0 %v1098
  %v1169 = vpop.f32.mrf.mxu0
  %v1170 = vadd.f32 0.0, %v1169
  %v1171 = vpop.f32.mrf.mxu0
  %1172 = vmatprep.mubr.f32.mxu0 0.0
  %1173 = vmatmul.mubr.f32.gmra.mxu0 %v1101
  %v1174 = vpop.f32.mrf.mxu0
  %v1175 = vadd.f32 0.0, %v1174
  %v1176 = vpop.f32.mrf.mxu0
  %1177 = vdwg.mxu0
  %v1178 = vadd.f32 %v968, %v1170
  %v1179 = vadd.f32 %v969, %v1175
  %v1180 = vlaneseq
  %v1181 = vshrl.u32 %v1180, 7
  %v1182 = vsub.s32 0, %v1181
  %v1183 = vrot.slane %v975, %v1182
  %v1184 = vadd.f32 %v1178, %v1183
  %v1185 = vadd.f32 %v1179, %v1183
  %v1186 = vld [vmem:[%s2 + $0x166] sm:$0x1]
  %v1187 = vld [vmem:[%s2 + $0x167] sm:$0x1]
  %v1188 = vld [vmem:[%s2 + $0x168] sm:$0x1]
  %v1189 = vld [vmem:[%s2 + $0x169] sm:$0x1]
  %v1190 = vlaneseq
  %v1191 = vshrl.u32 %v1190, 7
  %v1192 = vsub.s32 0, %v1191
  %v1193 = vrot.slane %v1186, %v1192
  %v1194 = vmul.f32 %v1184, %v1193
  %v1195 = vmul.f32 %v1185, %v1193
  %v1196 = vlaneseq
  %v1197 = vshrl.u32 %v1196, 7
  %v1198 = vsub.s32 0, %v1197
  %v1199 = vrot.slane %v1187, %v1198
  %v1200 = vadd.f32 %v1194, %v1199
  %v1201 = vadd.f32 %v1195, %v1199
  %v1202 = vmax.f32 %v1200, 0.0
  %v1203 = vmax.f32 %v1201, 0.0
  %v1204 = vlaneseq
  %v1205 = vshrl.u32 %v1204, 7
  %v1206 = vsub.s32 0, %v1205
  %v1207 = vrot.slane %v1188, %v1206
  %v1208 = vmul.f32 %v1202, %v1207
  %v1209 = vmul.f32 %v1203, %v1207
  %v1210 = vsel %vm137, %v1208, 0.0
  %1211 = vadd.xlane.f32.xlu0 %v1210
  %v1212 = vpop.xlane.xlu0 %1211
  %v1213 = vsel %vm137, %v1209, 0.0
  %1214 = vadd.xlane.f32.xlu0 %v1213
  %v1215 = vpop.xlane.xlu0 %1214
  %v1216 = vlaneseq
  %v1217 = vshrl.u32 %v1216, 7
  %v1218 = vsub.s32 0, %v1217
  %v1219 = vrot.slane %v1189, %v1218
  %v1220 = vadd.f32 %v1212, %v1219
  %v1221 = vadd.f32 %v1215, %v1219
  %vm1222 = vcmask 7168
  %1223 = vst.msk [vmem:[%s3] sm:$0xff] %vm1222, %v1220
  %1224 = vst.msk [vmem:[%s3 + $0x8] sm:$0xff] %vm1222, %v1221
  // Predicated region
  $region14: #{tpu_custom_call.1} parent=0 // pred_check
    _
  $region15: #{tpu_custom_call.1} parent=0 // pred_check_branch
    %1226 = sbr.rel (0) target = $region17
  $region16: #{tpu_custom_call.1} parent=0 // pred_region
    _
  $region17: #{tpu_custom_call.1} parent=0 // pred_fallthru
    _
  // Predicated region
  $region18: #{tpu_custom_call.1} parent=0 // pred_check
    _
  $region19: #{tpu_custom_call.1} parent=0 // pred_check_branch
    %1228 = sbr.rel (0) target = $region21
  $region20: #{tpu_custom_call.1} parent=0 // pred_region
    _
  $region21: #{tpu_custom_call.1} parent=0 // pred_fallthru
    _

</llo_original>
